<compile_context>
chip_gen: v7x
topology: tpu7x:2x2x1
jax: 0.10.0
libtpu: 0.0.40
codegen_flags: <defaults>
</compile_context>

<pallas_src>
import math
from functools import partial

import jax
import jax.numpy as jnp
from jax.experimental import pallas as pl
from jax.experimental.pallas import tpu as pltpu


def _layernorm(v, w, b, eps=1e-5):
    mu = jnp.mean(v, axis=-1, keepdims=True)
    var = jnp.mean(jnp.square(v - mu), axis=-1, keepdims=True)
    return (v - mu) * jax.lax.rsqrt(var + eps) * w + b


def _gelu_tanh(h):
    c = math.sqrt(2.0 / math.pi)
    return 0.5 * h * (1.0 + jnp.tanh(c * (h + 0.044715 * h * h * h)))


def block_kernel(x_ref,
                 ln1_w_ref, ln1_b_ref,
                 wqkv_ref, bqkv_ref,
                 wproj_ref, bproj_ref,
                 ln2_w_ref, ln2_b_ref,
                 wfc_ref, bfc_ref,
                 wproj2_ref, bproj2_ref,
                 o_ref,
                 *, n_head):
    Bblk, T, C = x_ref.shape
    M = Bblk * T
    hd = C // n_head
    scale = 1.0 / math.sqrt(hd)

    # Fold batch+sequence rows into one MXU M dimension for all dense matmuls.
    x = x_ref[...].astype(jnp.float32).reshape(M, C)

    # ---- attention branch ---------------------------------------------------
    h1 = _layernorm(x, ln1_w_ref[...], ln1_b_ref[...])
    qkv = (jnp.dot(h1, wqkv_ref[...], preferred_element_type=jnp.float32)
           + bqkv_ref[...])                                   # (M, 3C), one big matmul
    qkv = qkv.reshape(Bblk, T, 3 * C)

    # Additive causal mask, built once (replaces per-head jnp.where select).
    row = jax.lax.broadcasted_iota(jnp.int32, (T, T), 0)
    col = jax.lax.broadcasted_iota(jnp.int32, (T, T), 1)
    neg_mask = jnp.where(row >= col, 0.0, -1e30).astype(jnp.float32)[None, :, :]

    wproj = wproj_ref[...]
    y_att = jnp.zeros((M, C), jnp.float32)
    for h in range(n_head):                    # static unroll over heads
        lo = h * hd
        qh = qkv[:, :, lo:lo + hd] * scale                       # (Bblk, T, hd)
        kh = qkv[:, :, C + lo:C + lo + hd]                       # (Bblk, T, hd)
        vh = qkv[:, :, 2 * C + lo:2 * C + lo + hd]               # (Bblk, T, hd)

        # scores: contract over hd of both operands (no materialized k.T)
        s = jax.lax.dot_general(qh, kh, (((2,), (2,)), ((0,), (0,))),
                                preferred_element_type=jnp.float32)  # (Bblk,T,T)
        s = s + neg_mask
        s = s - jnp.max(s, axis=-1, keepdims=True)
        p = jnp.exp(s)
        p = p * pl.reciprocal(jnp.sum(p, axis=-1, keepdims=True), approx=True)

        yh = jax.lax.dot_general(p, vh, (((2,), (1,)), ((0,), (0,))),
                                 preferred_element_type=jnp.float32)  # (Bblk,T,hd)

        # Accumulate the output projection per head instead of concatenating.
        y_att = y_att + jnp.dot(yh.reshape(M, hd), wproj[lo:lo + hd, :],
                                preferred_element_type=jnp.float32)

    x = x + y_att + bproj_ref[...]              # residual 1

    # ---- MLP branch ----------------------------------------------------------
    h2 = _layernorm(x, ln2_w_ref[...], ln2_b_ref[...])
    hfc = (jnp.dot(h2, wfc_ref[...], preferred_element_type=jnp.float32)
           + bfc_ref[...])
    g = _gelu_tanh(hfc)
    m = (jnp.dot(g, wproj2_ref[...], preferred_element_type=jnp.float32)
         + bproj2_ref[...])

    o_ref[...] = (x + m).reshape(Bblk, T, C).astype(o_ref.dtype)  # residual 2


def _choose_bblk(B, T, target_rows=256):
    """Largest divisor of B whose folded row count Bblk*T stays <= target_rows."""
    best = 1
    for d in range(1, B + 1):
        if B % d == 0 and d * T <= max(target_rows, T):
            best = d
    return best


def block_forward(x, params, n_head):
    B, T, C = x.shape
    bblk = _choose_bblk(B, T)
    grid = (B // bblk,)
    M = bblk * T

    args = (
        x,
        params["ln1_w"], params["ln1_b"],
        params["wqkv"], params["bqkv"],
        params["wproj"], params["bproj"],
        params["ln2_w"], params["ln2_b"],
        params["wfc"], params["bfc"],
        params["wproj2"], params["bproj2"],
    )

    # Explicit VMEM budget: 2x-buffered weights + in/out tiles + f32 activations.
    weight_bytes = sum(int(a.size) * a.dtype.itemsize for a in args[1:])
    io_tile_bytes = M * C * x.dtype.itemsize
    act_bytes = 4 * M * (C + 3 * C + 4 * C + 2 * C) + 4 * bblk * T * T * 2
    vmem_limit = int(min(64 * 2**20,
                         max(16 * 2**20,
                             2 * weight_bytes + 4 * io_tile_bytes
                             + 2 * act_bytes + (2 << 20))))

    def full(a):
        return pl.BlockSpec(a.shape, lambda b: (0,) * a.ndim)

    in_specs = [pl.BlockSpec((bblk, T, C), lambda b: (b, 0, 0))] + \
               [full(a) for a in args[1:]]

    return pl.pallas_call(
        partial(block_kernel, n_head=n_head),
        out_shape=jax.ShapeDtypeStruct((B, T, C), x.dtype),
        grid_spec=pltpu.PrefetchScalarGridSpec(
            num_scalar_prefetch=0,
            grid=grid,
            in_specs=in_specs,
            out_specs=pl.BlockSpec((bblk, T, C), lambda b: (b, 0, 0)),
        ),
        compiler_params=pltpu.CompilerParams(
            dimension_semantics=("parallel",),
            vmem_limit_bytes=vmem_limit),
    )(*args)


# ---------------- pure-JAX reference (for validation) -----------------------
def block_reference(x, params, n_head):
    B, T, C = x.shape
    hd = C // n_head

    def ln(v, w, b):
        mu = v.mean(-1, keepdims=True)
        var = ((v - mu) ** 2).mean(-1, keepdims=True)
        return (v - mu) / jnp.sqrt(var + 1e-5) * w + b

    h1 = ln(x, params["ln1_w"], params["ln1_b"])
    qkv = h1 @ params["wqkv"] + params["bqkv"]
    q, k, v = jnp.split(qkv, 3, axis=-1)
    q = q.reshape(B, T, n_head, hd).transpose(0, 2, 1, 3)
    k = k.reshape(B, T, n_head, hd).transpose(0, 2, 1, 3)
    v = v.reshape(B, T, n_head, hd).transpose(0, 2, 1, 3)
    s = (q @ k.transpose(0, 1, 3, 2)) / math.sqrt(hd)
    mask = jnp.tril(jnp.ones((T, T), dtype=bool))
    s = jnp.where(mask, s, -jnp.inf)
    p = jax.nn.softmax(s, axis=-1)
    y = (p @ v).transpose(0, 2, 1, 3).reshape(B, T, C)
    y = y @ params["wproj"] + params["bproj"]
    x = x + y
    h2 = ln(x, params["ln2_w"], params["ln2_b"])
    hfc = h2 @ params["wfc"] + params["bfc"]
    g = 0.5 * hfc * (1.0 + jnp.tanh(math.sqrt(2.0 / math.pi) * (hfc + 0.044715 * hfc ** 3)))
    m = g @ params["wproj2"] + params["bproj2"]
    return x + m


if __name__ == "__main__":
    # config: n_embd=32, n_head=4, block_size >= T
    B, T, C, H = 2, 8, 32, 4
    key = jax.random.PRNGKey(0)
    ks = jax.random.split(key, 8)

    # Deterministic synthetic parameters (PyTorch Linear weight (out,in) stored
    # pre-transposed as (in,out) so y = x @ W + b).
    params = {
        "ln1_w": jnp.ones((1, C), jnp.float32),
        "ln1_b": jnp.zeros((1, C), jnp.float32),
        "wqkv": 0.02 * jax.random.normal(ks[0], (C, 3 * C), jnp.float32),
        "bqkv": 0.01 * jax.random.normal(ks[1], (1, 3 * C), jnp.float32),
        "wproj": 0.02 * jax.random.normal(ks[2], (C, C), jnp.float32),
        "bproj": 0.01 * jax.random.normal(ks[3], (1, C), jnp.float32),
        "ln2_w": jnp.ones((1, C), jnp.float32),
        "ln2_b": jnp.zeros((1, C), jnp.float32),
        "wfc": 0.02 * jax.random.normal(ks[4], (C, 4 * C), jnp.float32),
        "bfc": 0.01 * jax.random.normal(ks[5], (1, 4 * C), jnp.float32),
        "wproj2": 0.02 * jax.random.normal(ks[6], (4 * C, C), jnp.float32),
        "bproj2": 0.01 * jax.random.normal(ks[7], (1, C), jnp.float32),
    }

    x = jax.random.normal(jax.random.PRNGKey(42), (B, T, C), jnp.float32)

    out = block_forward(x, params, n_head=H)
    out = jax.block_until_ready(out)

    ref = block_reference(x, params, n_head=H)
    assert out.shape == (B, T, C)
    # Tolerance slightly looser than exact-f32 because the kernel uses the
    # EUP approximate reciprocal for the softmax denominator.
    assert jnp.allclose(out, ref, atol=5e-4, rtol=5e-4), "mismatch vs reference"

    print("KERNEL_OK")
</pallas_src>

<mosaic_0001>
module attributes {stable_mosaic.version = 11 : i64} {
  func.func @block_kernel(%arg0: i32, %arg1: memref<2x8x32xf32, #tpu.memory_space<vmem>>, %arg2: memref<1x32xf32, #tpu.memory_space<vmem>>, %arg3: memref<1x32xf32, #tpu.memory_space<vmem>>, %arg4: memref<32x96xf32, #tpu.memory_space<vmem>>, %arg5: memref<1x96xf32, #tpu.memory_space<vmem>>, %arg6: memref<32x32xf32, #tpu.memory_space<vmem>>, %arg7: memref<1x32xf32, #tpu.memory_space<vmem>>, %arg8: memref<1x32xf32, #tpu.memory_space<vmem>>, %arg9: memref<1x32xf32, #tpu.memory_space<vmem>>, %arg10: memref<32x128xf32, #tpu.memory_space<vmem>>, %arg11: memref<1x128xf32, #tpu.memory_space<vmem>>, %arg12: memref<128x32xf32, #tpu.memory_space<vmem>>, %arg13: memref<1x32xf32, #tpu.memory_space<vmem>>, %arg14: memref<2x8x32xf32, #tpu.memory_space<vmem>>) attributes {dimension_semantics = [#tpu.dimension_semantics<parallel>], iteration_bounds = array<i64: 1>, scalar_prefetch = 0 : i64, scratch_operands = 0 : i64, tpu.core_type = #tpu.core_type<tc>, window_params = [{transform_indices = @transform_0, window_bounds = array<i64: 2, 8, 32>}, {pipeline_mode = #tpu.pipeline_mode<synchronous>, transform_indices = @transform_1, window_bounds = array<i64: 1, 32>}, {pipeline_mode = #tpu.pipeline_mode<synchronous>, transform_indices = @transform_2, window_bounds = array<i64: 1, 32>}, {pipeline_mode = #tpu.pipeline_mode<synchronous>, transform_indices = @transform_3, window_bounds = array<i64: 32, 96>}, {pipeline_mode = #tpu.pipeline_mode<synchronous>, transform_indices = @transform_4, window_bounds = array<i64: 1, 96>}, {pipeline_mode = #tpu.pipeline_mode<synchronous>, transform_indices = @transform_5, window_bounds = array<i64: 32, 32>}, {pipeline_mode = #tpu.pipeline_mode<synchronous>, transform_indices = @transform_6, window_bounds = array<i64: 1, 32>}, {pipeline_mode = #tpu.pipeline_mode<synchronous>, transform_indices = @transform_7, window_bounds = array<i64: 1, 32>}, {pipeline_mode = #tpu.pipeline_mode<synchronous>, transform_indices = @transform_8, window_bounds = array<i64: 1, 32>}, {pipeline_mode = #tpu.pipeline_mode<synchronous>, transform_indices = @transform_9, window_bounds = array<i64: 32, 128>}, {pipeline_mode = #tpu.pipeline_mode<synchronous>, transform_indices = @transform_10, window_bounds = array<i64: 1, 128>}, {pipeline_mode = #tpu.pipeline_mode<synchronous>, transform_indices = @transform_11, window_bounds = array<i64: 128, 32>}, {pipeline_mode = #tpu.pipeline_mode<synchronous>, transform_indices = @transform_12, window_bounds = array<i64: 1, 32>}, {transform_indices = @transform_13, window_bounds = array<i64: 2, 8, 32>}]} {
    %c0 = arith.constant 0 : index
    %c0_0 = arith.constant 0 : index
    %c0_1 = arith.constant 0 : index
    %0 = vector.load %arg1[%c0, %c0_0, %c0_1] : memref<2x8x32xf32, #tpu.memory_space<vmem>>, vector<2x8x32xf32>
    %1 = vector.shape_cast %0 : vector<2x8x32xf32> to vector<16x32xf32>
    %c0_2 = arith.constant 0 : index
    %c0_3 = arith.constant 0 : index
    %2 = vector.load %arg2[%c0_2, %c0_3] : memref<1x32xf32, #tpu.memory_space<vmem>>, vector<1x32xf32>
    %c0_4 = arith.constant 0 : index
    %c0_5 = arith.constant 0 : index
    %3 = vector.load %arg3[%c0_4, %c0_5] : memref<1x32xf32, #tpu.memory_space<vmem>>, vector<1x32xf32>
    %cst = arith.constant dense<0.000000e+00> : vector<16xf32>
    %4 = vector.multi_reduction <add>, %1, %cst [1] : vector<16x32xf32> to vector<16xf32>
    %5 = vector.shape_cast %4 : vector<16xf32> to vector<16x1xf32>
    %cst_6 = arith.constant 3.200000e+01 : f32
    %6 = vector.broadcast %cst_6 : f32 to vector<16x1xf32>
    %7 = arith.divf %5, %6 : vector<16x1xf32>
    %8 = vector.broadcast %7 : vector<16x1xf32> to vector<16x32xf32>
    %9 = arith.subf %1, %8 : vector<16x32xf32>
    %10 = arith.mulf %9, %9 : vector<16x32xf32>
    %cst_7 = arith.constant dense<0.000000e+00> : vector<16xf32>
    %11 = vector.multi_reduction <add>, %10, %cst_7 [1] : vector<16x32xf32> to vector<16xf32>
    %12 = vector.shape_cast %11 : vector<16xf32> to vector<16x1xf32>
    %cst_8 = arith.constant 3.200000e+01 : f32
    %13 = vector.broadcast %cst_8 : f32 to vector<16x1xf32>
    %14 = arith.divf %12, %13 : vector<16x1xf32>
    %15 = vector.broadcast %7 : vector<16x1xf32> to vector<16x32xf32>
    %16 = arith.subf %1, %15 : vector<16x32xf32>
    %cst_9 = arith.constant 9.99999974E-6 : f32
    %17 = vector.broadcast %cst_9 : f32 to vector<16x1xf32>
    %18 = arith.addf %14, %17 : vector<16x1xf32>
    %19 = math.rsqrt %18 : vector<16x1xf32>
    %20 = vector.broadcast %19 : vector<16x1xf32> to vector<16x32xf32>
    %21 = arith.mulf %16, %20 : vector<16x32xf32>
    %22 = vector.broadcast %2 : vector<1x32xf32> to vector<16x32xf32>
    %23 = arith.mulf %21, %22 : vector<16x32xf32>
    %24 = vector.broadcast %3 : vector<1x32xf32> to vector<16x32xf32>
    %25 = arith.addf %23, %24 : vector<16x32xf32>
    %c0_10 = arith.constant 0 : index
    %c0_11 = arith.constant 0 : index
    %26 = vector.load %arg4[%c0_10, %c0_11] : memref<32x96xf32, #tpu.memory_space<vmem>>, vector<32x96xf32>
    %cst_12 = arith.constant dense<0.000000e+00> : vector<16x96xf32>
    %27 = tpu.matmul %25, %26, %cst_12 {dimension_numbers = #tpu.dot_dimension_numbers<[1], [0], [0], [1], [0, 0, 1, 1], [], []>} : vector<16x32xf32>, vector<32x96xf32>, vector<16x96xf32> -> vector<16x96xf32>
    %c0_13 = arith.constant 0 : index
    %c0_14 = arith.constant 0 : index
    %28 = vector.load %arg5[%c0_13, %c0_14] : memref<1x96xf32, #tpu.memory_space<vmem>>, vector<1x96xf32>
    %29 = vector.broadcast %28 : vector<1x96xf32> to vector<16x96xf32>
    %30 = arith.addf %27, %29 : vector<16x96xf32>
    %31 = vector.shape_cast %30 : vector<16x96xf32> to vector<2x8x96xf32>
    %32 = tpu.iota {dimensions = array<i32: 0>} : vector<8x8xi32>
    %33 = tpu.iota {dimensions = array<i32: 1>} : vector<8x8xi32>
    %34 = arith.cmpi sge, %32, %33 : vector<8x8xi32>
    %cst_15 = arith.constant 0.000000e+00 : f32
    %cst_16 = arith.constant -1.000000e+30 : f32
    %35 = vector.broadcast %cst_15 : f32 to vector<8x8xf32>
    %36 = vector.broadcast %cst_16 : f32 to vector<8x8xf32>
    %37 = arith.select %34, %35, %36 : vector<8x8xi1>, vector<8x8xf32>
    %38 = vector.shape_cast %37 : vector<8x8xf32> to vector<1x8x8xf32>
    %c0_17 = arith.constant 0 : index
    %c0_18 = arith.constant 0 : index
    %39 = vector.load %arg6[%c0_17, %c0_18] : memref<32x32xf32, #tpu.memory_space<vmem>>, vector<32x32xf32>
    %cst_19 = arith.constant 0.000000e+00 : f32
    %40 = vector.broadcast %cst_19 : f32 to vector<16x32xf32>
    %41 = vector.extract_strided_slice %31 {offsets = [0, 0, 0], sizes = [2, 8, 8], strides = [1, 1, 1]} : vector<2x8x96xf32> to vector<2x8x8xf32>
    %cst_20 = arith.constant 0.353553385 : f32
    %42 = vector.broadcast %cst_20 : f32 to vector<2x8x8xf32>
    %43 = arith.mulf %41, %42 : vector<2x8x8xf32>
    %44 = vector.extract_strided_slice %31 {offsets = [0, 0, 32], sizes = [2, 8, 8], strides = [1, 1, 1]} : vector<2x8x96xf32> to vector<2x8x8xf32>
    %45 = vector.extract_strided_slice %31 {offsets = [0, 0, 64], sizes = [2, 8, 8], strides = [1, 1, 1]} : vector<2x8x96xf32> to vector<2x8x8xf32>
    %cst_21 = arith.constant dense<0.000000e+00> : vector<2x8x8xf32>
    %46 = tpu.matmul %43, %44, %cst_21 {dimension_numbers = #tpu.dot_dimension_numbers<[2], [2], [1], [1], [0, 0, 0, 1, 1, 1], [0], [0]>} : vector<2x8x8xf32>, vector<2x8x8xf32>, vector<2x8x8xf32> -> vector<2x8x8xf32>
    %47 = vector.broadcast %38 : vector<1x8x8xf32> to vector<2x8x8xf32>
    %48 = arith.addf %46, %47 : vector<2x8x8xf32>
    %cst_22 = arith.constant dense<0xFF800000> : vector<2x8xf32>
    %49 = vector.multi_reduction <maximumf>, %48, %cst_22 [2] : vector<2x8x8xf32> to vector<2x8xf32>
    %50 = vector.shape_cast %49 : vector<2x8xf32> to vector<2x8x1xf32>
    %51 = vector.broadcast %50 : vector<2x8x1xf32> to vector<2x8x8xf32>
    %52 = arith.subf %48, %51 : vector<2x8x8xf32>
    %53 = math.exp %52 : vector<2x8x8xf32>
    %cst_23 = arith.constant dense<0.000000e+00> : vector<2x8xf32>
    %54 = vector.multi_reduction <add>, %53, %cst_23 [2] : vector<2x8x8xf32> to vector<2x8xf32>
    %55 = vector.shape_cast %54 : vector<2x8xf32> to vector<2x8x1xf32>
    %56 = tpu.reciprocal %55 {approx = true} : vector<2x8x1xf32> -> vector<2x8x1xf32>
    %57 = vector.broadcast %56 : vector<2x8x1xf32> to vector<2x8x8xf32>
    %58 = arith.mulf %53, %57 : vector<2x8x8xf32>
    %cst_24 = arith.constant dense<0.000000e+00> : vector<2x8x8xf32>
    %59 = tpu.matmul %58, %45, %cst_24 {dimension_numbers = #tpu.dot_dimension_numbers<[2], [1], [1], [2], [0, 0, 0, 1, 1, 2], [0], [0]>} : vector<2x8x8xf32>, vector<2x8x8xf32>, vector<2x8x8xf32> -> vector<2x8x8xf32>
    %60 = vector.shape_cast %59 : vector<2x8x8xf32> to vector<16x8xf32>
    %61 = vector.extract_strided_slice %39 {offsets = [0, 0], sizes = [8, 32], strides = [1, 1]} : vector<32x32xf32> to vector<8x32xf32>
    %cst_25 = arith.constant dense<0.000000e+00> : vector<16x32xf32>
    %62 = tpu.matmul %60, %61, %cst_25 {dimension_numbers = #tpu.dot_dimension_numbers<[1], [0], [0], [1], [0, 0, 1, 1], [], []>} : vector<16x8xf32>, vector<8x32xf32>, vector<16x32xf32> -> vector<16x32xf32>
    %63 = arith.addf %40, %62 : vector<16x32xf32>
    %64 = vector.extract_strided_slice %31 {offsets = [0, 0, 8], sizes = [2, 8, 8], strides = [1, 1, 1]} : vector<2x8x96xf32> to vector<2x8x8xf32>
    %cst_26 = arith.constant 0.353553385 : f32
    %65 = vector.broadcast %cst_26 : f32 to vector<2x8x8xf32>
    %66 = arith.mulf %64, %65 : vector<2x8x8xf32>
    %67 = vector.extract_strided_slice %31 {offsets = [0, 0, 40], sizes = [2, 8, 8], strides = [1, 1, 1]} : vector<2x8x96xf32> to vector<2x8x8xf32>
    %68 = vector.extract_strided_slice %31 {offsets = [0, 0, 72], sizes = [2, 8, 8], strides = [1, 1, 1]} : vector<2x8x96xf32> to vector<2x8x8xf32>
    %cst_27 = arith.constant dense<0.000000e+00> : vector<2x8x8xf32>
    %69 = tpu.matmul %66, %67, %cst_27 {dimension_numbers = #tpu.dot_dimension_numbers<[2], [2], [1], [1], [0, 0, 0, 1, 1, 1], [0], [0]>} : vector<2x8x8xf32>, vector<2x8x8xf32>, vector<2x8x8xf32> -> vector<2x8x8xf32>
    %70 = vector.broadcast %38 : vector<1x8x8xf32> to vector<2x8x8xf32>
    %71 = arith.addf %69, %70 : vector<2x8x8xf32>
    %cst_28 = arith.constant dense<0xFF800000> : vector<2x8xf32>
    %72 = vector.multi_reduction <maximumf>, %71, %cst_28 [2] : vector<2x8x8xf32> to vector<2x8xf32>
    %73 = vector.shape_cast %72 : vector<2x8xf32> to vector<2x8x1xf32>
    %74 = vector.broadcast %73 : vector<2x8x1xf32> to vector<2x8x8xf32>
    %75 = arith.subf %71, %74 : vector<2x8x8xf32>
    %76 = math.exp %75 : vector<2x8x8xf32>
    %cst_29 = arith.constant dense<0.000000e+00> : vector<2x8xf32>
    %77 = vector.multi_reduction <add>, %76, %cst_29 [2] : vector<2x8x8xf32> to vector<2x8xf32>
    %78 = vector.shape_cast %77 : vector<2x8xf32> to vector<2x8x1xf32>
    %79 = tpu.reciprocal %78 {approx = true} : vector<2x8x1xf32> -> vector<2x8x1xf32>
    %80 = vector.broadcast %79 : vector<2x8x1xf32> to vector<2x8x8xf32>
    %81 = arith.mulf %76, %80 : vector<2x8x8xf32>
    %cst_30 = arith.constant dense<0.000000e+00> : vector<2x8x8xf32>
    %82 = tpu.matmul %81, %68, %cst_30 {dimension_numbers = #tpu.dot_dimension_numbers<[2], [1], [1], [2], [0, 0, 0, 1, 1, 2], [0], [0]>} : vector<2x8x8xf32>, vector<2x8x8xf32>, vector<2x8x8xf32> -> vector<2x8x8xf32>
    %83 = vector.shape_cast %82 : vector<2x8x8xf32> to vector<16x8xf32>
    %84 = vector.extract_strided_slice %39 {offsets = [8, 0], sizes = [8, 32], strides = [1, 1]} : vector<32x32xf32> to vector<8x32xf32>
    %cst_31 = arith.constant dense<0.000000e+00> : vector<16x32xf32>
    %85 = tpu.matmul %83, %84, %cst_31 {dimension_numbers = #tpu.dot_dimension_numbers<[1], [0], [0], [1], [0, 0, 1, 1], [], []>} : vector<16x8xf32>, vector<8x32xf32>, vector<16x32xf32> -> vector<16x32xf32>
    %86 = arith.addf %63, %85 : vector<16x32xf32>
    %87 = vector.extract_strided_slice %31 {offsets = [0, 0, 16], sizes = [2, 8, 8], strides = [1, 1, 1]} : vector<2x8x96xf32> to vector<2x8x8xf32>
    %cst_32 = arith.constant 0.353553385 : f32
    %88 = vector.broadcast %cst_32 : f32 to vector<2x8x8xf32>
    %89 = arith.mulf %87, %88 : vector<2x8x8xf32>
    %90 = vector.extract_strided_slice %31 {offsets = [0, 0, 48], sizes = [2, 8, 8], strides = [1, 1, 1]} : vector<2x8x96xf32> to vector<2x8x8xf32>
    %91 = vector.extract_strided_slice %31 {offsets = [0, 0, 80], sizes = [2, 8, 8], strides = [1, 1, 1]} : vector<2x8x96xf32> to vector<2x8x8xf32>
    %cst_33 = arith.constant dense<0.000000e+00> : vector<2x8x8xf32>
    %92 = tpu.matmul %89, %90, %cst_33 {dimension_numbers = #tpu.dot_dimension_numbers<[2], [2], [1], [1], [0, 0, 0, 1, 1, 1], [0], [0]>} : vector<2x8x8xf32>, vector<2x8x8xf32>, vector<2x8x8xf32> -> vector<2x8x8xf32>
    %93 = vector.broadcast %38 : vector<1x8x8xf32> to vector<2x8x8xf32>
    %94 = arith.addf %92, %93 : vector<2x8x8xf32>
    %cst_34 = arith.constant dense<0xFF800000> : vector<2x8xf32>
    %95 = vector.multi_reduction <maximumf>, %94, %cst_34 [2] : vector<2x8x8xf32> to vector<2x8xf32>
    %96 = vector.shape_cast %95 : vector<2x8xf32> to vector<2x8x1xf32>
    %97 = vector.broadcast %96 : vector<2x8x1xf32> to vector<2x8x8xf32>
    %98 = arith.subf %94, %97 : vector<2x8x8xf32>
    %99 = math.exp %98 : vector<2x8x8xf32>
    %cst_35 = arith.constant dense<0.000000e+00> : vector<2x8xf32>
    %100 = vector.multi_reduction <add>, %99, %cst_35 [2] : vector<2x8x8xf32> to vector<2x8xf32>
    %101 = vector.shape_cast %100 : vector<2x8xf32> to vector<2x8x1xf32>
    %102 = tpu.reciprocal %101 {approx = true} : vector<2x8x1xf32> -> vector<2x8x1xf32>
    %103 = vector.broadcast %102 : vector<2x8x1xf32> to vector<2x8x8xf32>
    %104 = arith.mulf %99, %103 : vector<2x8x8xf32>
    %cst_36 = arith.constant dense<0.000000e+00> : vector<2x8x8xf32>
    %105 = tpu.matmul %104, %91, %cst_36 {dimension_numbers = #tpu.dot_dimension_numbers<[2], [1], [1], [2], [0, 0, 0, 1, 1, 2], [0], [0]>} : vector<2x8x8xf32>, vector<2x8x8xf32>, vector<2x8x8xf32> -> vector<2x8x8xf32>
    %106 = vector.shape_cast %105 : vector<2x8x8xf32> to vector<16x8xf32>
    %107 = vector.extract_strided_slice %39 {offsets = [16, 0], sizes = [8, 32], strides = [1, 1]} : vector<32x32xf32> to vector<8x32xf32>
    %cst_37 = arith.constant dense<0.000000e+00> : vector<16x32xf32>
    %108 = tpu.matmul %106, %107, %cst_37 {dimension_numbers = #tpu.dot_dimension_numbers<[1], [0], [0], [1], [0, 0, 1, 1], [], []>} : vector<16x8xf32>, vector<8x32xf32>, vector<16x32xf32> -> vector<16x32xf32>
    %109 = arith.addf %86, %108 : vector<16x32xf32>
    %110 = vector.extract_strided_slice %31 {offsets = [0, 0, 24], sizes = [2, 8, 8], strides = [1, 1, 1]} : vector<2x8x96xf32> to vector<2x8x8xf32>
    %cst_38 = arith.constant 0.353553385 : f32
    %111 = vector.broadcast %cst_38 : f32 to vector<2x8x8xf32>
    %112 = arith.mulf %110, %111 : vector<2x8x8xf32>
    %113 = vector.extract_strided_slice %31 {offsets = [0, 0, 56], sizes = [2, 8, 8], strides = [1, 1, 1]} : vector<2x8x96xf32> to vector<2x8x8xf32>
    %114 = vector.extract_strided_slice %31 {offsets = [0, 0, 88], sizes = [2, 8, 8], strides = [1, 1, 1]} : vector<2x8x96xf32> to vector<2x8x8xf32>
    %cst_39 = arith.constant dense<0.000000e+00> : vector<2x8x8xf32>
    %115 = tpu.matmul %112, %113, %cst_39 {dimension_numbers = #tpu.dot_dimension_numbers<[2], [2], [1], [1], [0, 0, 0, 1, 1, 1], [0], [0]>} : vector<2x8x8xf32>, vector<2x8x8xf32>, vector<2x8x8xf32> -> vector<2x8x8xf32>
    %116 = vector.broadcast %38 : vector<1x8x8xf32> to vector<2x8x8xf32>
    %117 = arith.addf %115, %116 : vector<2x8x8xf32>
    %cst_40 = arith.constant dense<0xFF800000> : vector<2x8xf32>
    %118 = vector.multi_reduction <maximumf>, %117, %cst_40 [2] : vector<2x8x8xf32> to vector<2x8xf32>
    %119 = vector.shape_cast %118 : vector<2x8xf32> to vector<2x8x1xf32>
    %120 = vector.broadcast %119 : vector<2x8x1xf32> to vector<2x8x8xf32>
    %121 = arith.subf %117, %120 : vector<2x8x8xf32>
    %122 = math.exp %121 : vector<2x8x8xf32>
    %cst_41 = arith.constant dense<0.000000e+00> : vector<2x8xf32>
    %123 = vector.multi_reduction <add>, %122, %cst_41 [2] : vector<2x8x8xf32> to vector<2x8xf32>
    %124 = vector.shape_cast %123 : vector<2x8xf32> to vector<2x8x1xf32>
    %125 = tpu.reciprocal %124 {approx = true} : vector<2x8x1xf32> -> vector<2x8x1xf32>
    %126 = vector.broadcast %125 : vector<2x8x1xf32> to vector<2x8x8xf32>
    %127 = arith.mulf %122, %126 : vector<2x8x8xf32>
    %cst_42 = arith.constant dense<0.000000e+00> : vector<2x8x8xf32>
    %128 = tpu.matmul %127, %114, %cst_42 {dimension_numbers = #tpu.dot_dimension_numbers<[2], [1], [1], [2], [0, 0, 0, 1, 1, 2], [0], [0]>} : vector<2x8x8xf32>, vector<2x8x8xf32>, vector<2x8x8xf32> -> vector<2x8x8xf32>
    %129 = vector.shape_cast %128 : vector<2x8x8xf32> to vector<16x8xf32>
    %130 = vector.extract_strided_slice %39 {offsets = [24, 0], sizes = [8, 32], strides = [1, 1]} : vector<32x32xf32> to vector<8x32xf32>
    %cst_43 = arith.constant dense<0.000000e+00> : vector<16x32xf32>
    %131 = tpu.matmul %129, %130, %cst_43 {dimension_numbers = #tpu.dot_dimension_numbers<[1], [0], [0], [1], [0, 0, 1, 1], [], []>} : vector<16x8xf32>, vector<8x32xf32>, vector<16x32xf32> -> vector<16x32xf32>
    %132 = arith.addf %109, %131 : vector<16x32xf32>
    %133 = arith.addf %1, %132 : vector<16x32xf32>
    %c0_44 = arith.constant 0 : index
    %c0_45 = arith.constant 0 : index
    %134 = vector.load %arg7[%c0_44, %c0_45] : memref<1x32xf32, #tpu.memory_space<vmem>>, vector<1x32xf32>
    %135 = vector.broadcast %134 : vector<1x32xf32> to vector<16x32xf32>
    %136 = arith.addf %133, %135 : vector<16x32xf32>
    %c0_46 = arith.constant 0 : index
    %c0_47 = arith.constant 0 : index
    %137 = vector.load %arg8[%c0_46, %c0_47] : memref<1x32xf32, #tpu.memory_space<vmem>>, vector<1x32xf32>
    %c0_48 = arith.constant 0 : index
    %c0_49 = arith.constant 0 : index
    %138 = vector.load %arg9[%c0_48, %c0_49] : memref<1x32xf32, #tpu.memory_space<vmem>>, vector<1x32xf32>
    %cst_50 = arith.constant dense<0.000000e+00> : vector<16xf32>
    %139 = vector.multi_reduction <add>, %136, %cst_50 [1] : vector<16x32xf32> to vector<16xf32>
    %140 = vector.shape_cast %139 : vector<16xf32> to vector<16x1xf32>
    %cst_51 = arith.constant 3.200000e+01 : f32
    %141 = vector.broadcast %cst_51 : f32 to vector<16x1xf32>
    %142 = arith.divf %140, %141 : vector<16x1xf32>
    %143 = vector.broadcast %142 : vector<16x1xf32> to vector<16x32xf32>
    %144 = arith.subf %136, %143 : vector<16x32xf32>
    %145 = arith.mulf %144, %144 : vector<16x32xf32>
    %cst_52 = arith.constant dense<0.000000e+00> : vector<16xf32>
    %146 = vector.multi_reduction <add>, %145, %cst_52 [1] : vector<16x32xf32> to vector<16xf32>
    %147 = vector.shape_cast %146 : vector<16xf32> to vector<16x1xf32>
    %cst_53 = arith.constant 3.200000e+01 : f32
    %148 = vector.broadcast %cst_53 : f32 to vector<16x1xf32>
    %149 = arith.divf %147, %148 : vector<16x1xf32>
    %150 = vector.broadcast %142 : vector<16x1xf32> to vector<16x32xf32>
    %151 = arith.subf %136, %150 : vector<16x32xf32>
    %cst_54 = arith.constant 9.99999974E-6 : f32
    %152 = vector.broadcast %cst_54 : f32 to vector<16x1xf32>
    %153 = arith.addf %149, %152 : vector<16x1xf32>
    %154 = math.rsqrt %153 : vector<16x1xf32>
    %155 = vector.broadcast %154 : vector<16x1xf32> to vector<16x32xf32>
    %156 = arith.mulf %151, %155 : vector<16x32xf32>
    %157 = vector.broadcast %137 : vector<1x32xf32> to vector<16x32xf32>
    %158 = arith.mulf %156, %157 : vector<16x32xf32>
    %159 = vector.broadcast %138 : vector<1x32xf32> to vector<16x32xf32>
    %160 = arith.addf %158, %159 : vector<16x32xf32>
    %c0_55 = arith.constant 0 : index
    %c0_56 = arith.constant 0 : index
    %161 = vector.load %arg10[%c0_55, %c0_56] : memref<32x128xf32, #tpu.memory_space<vmem>>, vector<32x128xf32>
    %cst_57 = arith.constant dense<0.000000e+00> : vector<16x128xf32>
    %162 = tpu.matmul %160, %161, %cst_57 {dimension_numbers = #tpu.dot_dimension_numbers<[1], [0], [0], [1], [0, 0, 1, 1], [], []>} : vector<16x32xf32>, vector<32x128xf32>, vector<16x128xf32> -> vector<16x128xf32>
    %c0_58 = arith.constant 0 : index
    %c0_59 = arith.constant 0 : index
    %163 = vector.load %arg11[%c0_58, %c0_59] : memref<1x128xf32, #tpu.memory_space<vmem>>, vector<1x128xf32>
    %164 = vector.broadcast %163 : vector<1x128xf32> to vector<16x128xf32>
    %165 = arith.addf %162, %164 : vector<16x128xf32>
    %cst_60 = arith.constant 5.000000e-01 : f32
    %166 = vector.broadcast %cst_60 : f32 to vector<16x128xf32>
    %167 = arith.mulf %166, %165 : vector<16x128xf32>
    %cst_61 = arith.constant 4.471500e-02 : f32
    %168 = vector.broadcast %cst_61 : f32 to vector<16x128xf32>
    %169 = arith.mulf %168, %165 : vector<16x128xf32>
    %170 = arith.mulf %169, %165 : vector<16x128xf32>
    %171 = arith.mulf %170, %165 : vector<16x128xf32>
    %172 = arith.addf %165, %171 : vector<16x128xf32>
    %cst_62 = arith.constant 0.797884583 : f32
    %173 = vector.broadcast %cst_62 : f32 to vector<16x128xf32>
    %174 = arith.mulf %173, %172 : vector<16x128xf32>
    %175 = math.tanh %174 : vector<16x128xf32>
    %cst_63 = arith.constant 1.000000e+00 : f32
    %176 = vector.broadcast %cst_63 : f32 to vector<16x128xf32>
    %177 = arith.addf %176, %175 : vector<16x128xf32>
    %178 = arith.mulf %167, %177 : vector<16x128xf32>
    %c0_64 = arith.constant 0 : index
    %c0_65 = arith.constant 0 : index
    %179 = vector.load %arg12[%c0_64, %c0_65] : memref<128x32xf32, #tpu.memory_space<vmem>>, vector<128x32xf32>
    %cst_66 = arith.constant dense<0.000000e+00> : vector<16x32xf32>
    %180 = tpu.matmul %178, %179, %cst_66 {dimension_numbers = #tpu.dot_dimension_numbers<[1], [0], [0], [1], [0, 0, 1, 1], [], []>} : vector<16x128xf32>, vector<128x32xf32>, vector<16x32xf32> -> vector<16x32xf32>
    %c0_67 = arith.constant 0 : index
    %c0_68 = arith.constant 0 : index
    %181 = vector.load %arg13[%c0_67, %c0_68] : memref<1x32xf32, #tpu.memory_space<vmem>>, vector<1x32xf32>
    %182 = vector.broadcast %181 : vector<1x32xf32> to vector<16x32xf32>
    %183 = arith.addf %180, %182 : vector<16x32xf32>
    %184 = arith.addf %136, %183 : vector<16x32xf32>
    %185 = vector.shape_cast %184 : vector<16x32xf32> to vector<2x8x32xf32>
    %c0_69 = arith.constant 0 : index
    %c0_70 = arith.constant 0 : index
    %c0_71 = arith.constant 0 : index
    %186 = vector.load %arg14[%c0_69, %c0_70, %c0_71] : memref<2x8x32xf32, #tpu.memory_space<vmem>>, vector<2x8x32xf32>
    tpu.vector_store %arg14[%c0_69, %c0_70, %c0_71], %185 {strides = array<i32>} : memref<2x8x32xf32, #tpu.memory_space<vmem>>, vector<2x8x32xf32>,
    return
  }
  func.func @transform_0(%arg0: i32) -> (i32, i32, i32) {
    %c0_i32 = arith.constant 0 : i32
    %c0_i32_0 = arith.constant 0 : i32
    %c0_i32_1 = arith.constant 0 : i32
    return %arg0, %c0_i32, %c0_i32_0 : i32, i32, i32
  }
  func.func @transform_1(%arg0: i32) -> (i32, i32) {
    %c0_i32 = arith.constant 0 : i32
    %c0_i32_0 = arith.constant 0 : i32
    %c0_i32_1 = arith.constant 0 : i32
    return %c0_i32, %c0_i32_0 : i32, i32
  }
  func.func @transform_2(%arg0: i32) -> (i32, i32) {
    %c0_i32 = arith.constant 0 : i32
    %c0_i32_0 = arith.constant 0 : i32
    %c0_i32_1 = arith.constant 0 : i32
    return %c0_i32, %c0_i32_0 : i32, i32
  }
  func.func @transform_3(%arg0: i32) -> (i32, i32) {
    %c0_i32 = arith.constant 0 : i32
    %c0_i32_0 = arith.constant 0 : i32
    %c0_i32_1 = arith.constant 0 : i32
    return %c0_i32, %c0_i32_0 : i32, i32
  }
  func.func @transform_4(%arg0: i32) -> (i32, i32) {
    %c0_i32 = arith.constant 0 : i32
    %c0_i32_0 = arith.constant 0 : i32
    %c0_i32_1 = arith.constant 0 : i32
    return %c0_i32, %c0_i32_0 : i32, i32
  }
  func.func @transform_5(%arg0: i32) -> (i32, i32) {
    %c0_i32 = arith.constant 0 : i32
    %c0_i32_0 = arith.constant 0 : i32
    %c0_i32_1 = arith.constant 0 : i32
    return %c0_i32, %c0_i32_0 : i32, i32
  }
  func.func @transform_6(%arg0: i32) -> (i32, i32) {
    %c0_i32 = arith.constant 0 : i32
    %c0_i32_0 = arith.constant 0 : i32
    %c0_i32_1 = arith.constant 0 : i32
    return %c0_i32, %c0_i32_0 : i32, i32
  }
  func.func @transform_7(%arg0: i32) -> (i32, i32) {
    %c0_i32 = arith.constant 0 : i32
    %c0_i32_0 = arith.constant 0 : i32
    %c0_i32_1 = arith.constant 0 : i32
    return %c0_i32, %c0_i32_0 : i32, i32
  }
  func.func @transform_8(%arg0: i32) -> (i32, i32) {
    %c0_i32 = arith.constant 0 : i32
    %c0_i32_0 = arith.constant 0 : i32
    %c0_i32_1 = arith.constant 0 : i32
    return %c0_i32, %c0_i32_0 : i32, i32
  }
  func.func @transform_9(%arg0: i32) -> (i32, i32) {
    %c0_i32 = arith.constant 0 : i32
    %c0_i32_0 = arith.constant 0 : i32
    %c0_i32_1 = arith.constant 0 : i32
    return %c0_i32, %c0_i32_0 : i32, i32
  }
  func.func @transform_10(%arg0: i32) -> (i32, i32) {
    %c0_i32 = arith.constant 0 : i32
    %c0_i32_0 = arith.constant 0 : i32
    %c0_i32_1 = arith.constant 0 : i32
    return %c0_i32, %c0_i32_0 : i32, i32
  }
  func.func @transform_11(%arg0: i32) -> (i32, i32) {
    %c0_i32 = arith.constant 0 : i32
    %c0_i32_0 = arith.constant 0 : i32
    %c0_i32_1 = arith.constant 0 : i32
    return %c0_i32, %c0_i32_0 : i32, i32
  }
  func.func @transform_12(%arg0: i32) -> (i32, i32) {
    %c0_i32 = arith.constant 0 : i32
    %c0_i32_0 = arith.constant 0 : i32
    %c0_i32_1 = arith.constant 0 : i32
    return %c0_i32, %c0_i32_0 : i32, i32
  }
  func.func @transform_13(%arg0: i32) -> (i32, i32, i32) {
    %c0_i32 = arith.constant 0 : i32
    %c0_i32_0 = arith.constant 0 : i32
    %c0_i32_1 = arith.constant 0 : i32
    return %arg0, %c0_i32, %c0_i32_0 : i32, i32, i32
  }
}

</mosaic_0001>

<llo_original>
// kernel: tpu_custom_call.1
$region0: #{tpu_custom_call.1}
  #allocation0 [shape = 'u32[]', space=smem, size = 0x4, offset = 0x4, fixed_abs, tag = 'smem constant byte address 0x4 - core index']
  #allocation1 [shape = 'u32[144,128]{1,0:T(1,128)}', space=vmem, size = 0x12000, scoped, tag = 'internal scratch']
  %s0 = inlined_call_operand.vmem [shape: f32[2,8,32], index: 0, kind: input, shape index: {}]
  %s1 = inlined_call_operand.vmem [shape: f32[1,32], index: 1, kind: input, shape index: {}]
  %s2 = inlined_call_operand.vmem [shape: f32[1,32], index: 2, kind: input, shape index: {}]
  %s3 = inlined_call_operand.vmem [shape: f32[32,96], index: 3, kind: input, shape index: {}]
  %s4 = inlined_call_operand.vmem [shape: f32[1,96], index: 4, kind: input, shape index: {}]
  %s5 = inlined_call_operand.vmem [shape: f32[32,32], index: 5, kind: input, shape index: {}]
  %s6 = inlined_call_operand.vmem [shape: f32[1,32], index: 6, kind: input, shape index: {}]
  %s7 = inlined_call_operand.vmem [shape: f32[1,32], index: 7, kind: input, shape index: {}]
  %s8 = inlined_call_operand.vmem [shape: f32[1,32], index: 8, kind: input, shape index: {}]
  %s9 = inlined_call_operand.vmem [shape: f32[32,128], index: 9, kind: input, shape index: {}]
  %s10 = inlined_call_operand.vmem [shape: f32[1,128], index: 10, kind: input, shape index: {}]
  %s11 = inlined_call_operand.vmem [shape: f32[128,32], index: 11, kind: input, shape index: {}]
  %s12 = inlined_call_operand.vmem [shape: f32[1,32], index: 12, kind: input, shape index: {}]
  %s13 = inlined_call_operand.hbm [shape: f32[2,8,32], index: 13, kind: output, shape index: {}]
  %s14 = sld [smem:[#allocation0]]
  $region62: #{tpu_custom_call.1} parent=0
    _
  %s16 = ssub.s32 1, %s14
  %s17 = scalar_select 0, %s16, %s14
  $region1: #{tpu_custom_call.1} parent=0
    #allocation2 [shape = 'u8[8192]{0}', space=vmem, size = 0x2000, scoped, tag = 'output window, operand 0, single buffered']
    #allocation3 [shape = 's32[1]{0}', space=sflag, size = 0x4, scoped, tag = 'scoped memory for tpu_custom_call.1']
    %18 = vsyncpa [#allocation3], 0
    // Predicated region
    $region2: #{tpu_custom_call.1} parent=1 // pred_check
      _
    $region3: #{tpu_custom_call.1} parent=1 // pred_check_branch
      %20 = sbr.rel (0) target = $region5
    $region4: #{tpu_custom_call.1} parent=1 // pred_region
      _
    $region5: #{tpu_custom_call.1} parent=1 // pred_fallthru
      _
    // Predicated region
    $region6: #{tpu_custom_call.1} parent=1 // pred_check
      _
    $region7: #{tpu_custom_call.1} parent=1 // pred_check_branch
      %22 = sbr.rel (0) target = $region9
    $region8: #{tpu_custom_call.1} parent=1 // pred_region
      _
    $region9: #{tpu_custom_call.1} parent=1 // pred_fallthru
      _
    // Predicated region
    $region10: #{tpu_custom_call.1} parent=1 // pred_check
      _
    $region11: #{tpu_custom_call.1} parent=1 // pred_check_branch
      %24 = sbr.rel (0) target = $region13
    $region12: #{tpu_custom_call.1} parent=1 // pred_region
      _
    $region13: #{tpu_custom_call.1} parent=1 // pred_fallthru
      _
    // Predicated region
    $region14: #{tpu_custom_call.1} parent=1 // pred_check
      _
    $region15: #{tpu_custom_call.1} parent=1 // pred_check_branch
      %26 = sbr.rel (0) target = $region17
    $region16: #{tpu_custom_call.1} parent=1 // pred_region
      _
    $region17: #{tpu_custom_call.1} parent=1 // pred_fallthru
      _
    // Predicated region
    $region18: #{tpu_custom_call.1} parent=1 // pred_check
      _
    $region19: #{tpu_custom_call.1} parent=1 // pred_check_branch
      %28 = sbr.rel (0) target = $region21
    $region20: #{tpu_custom_call.1} parent=1 // pred_region
      _
    $region21: #{tpu_custom_call.1} parent=1 // pred_fallthru
      _
    // Predicated region
    $region22: #{tpu_custom_call.1} parent=1 // pred_check
      _
    $region23: #{tpu_custom_call.1} parent=1 // pred_check_branch
      %30 = sbr.rel (0) target = $region25
    $region24: #{tpu_custom_call.1} parent=1 // pred_region
      _
    $region25: #{tpu_custom_call.1} parent=1 // pred_fallthru
      _
    // Predicated region
    $region26: #{tpu_custom_call.1} parent=1 // pred_check
      _
    $region27: #{tpu_custom_call.1} parent=1 // pred_check_branch
      %32 = sbr.rel (0) target = $region29
    $region28: #{tpu_custom_call.1} parent=1 // pred_region
      _
    $region29: #{tpu_custom_call.1} parent=1 // pred_fallthru
      _
    // Predicated region
    $region30: #{tpu_custom_call.1} parent=1 // pred_check
      _
    $region31: #{tpu_custom_call.1} parent=1 // pred_check_branch
      %34 = sbr.rel (0) target = $region33
    $region32: #{tpu_custom_call.1} parent=1 // pred_region
      _
    $region33: #{tpu_custom_call.1} parent=1 // pred_fallthru
      _
    // Predicated region
    $region34: #{tpu_custom_call.1} parent=1 // pred_check
      _
    $region35: #{tpu_custom_call.1} parent=1 // pred_check_branch
      %36 = sbr.rel (0) target = $region37
    $region36: #{tpu_custom_call.1} parent=1 // pred_region
      _
    $region37: #{tpu_custom_call.1} parent=1 // pred_fallthru
      _
    // Predicated region
    $region38: #{tpu_custom_call.1} parent=1 // pred_check
      _
    $region39: #{tpu_custom_call.1} parent=1 // pred_check_branch
      %38 = sbr.rel (0) target = $region41
    $region40: #{tpu_custom_call.1} parent=1 // pred_region
      _
    $region41: #{tpu_custom_call.1} parent=1 // pred_fallthru
      _
    // Predicated region
    $region42: #{tpu_custom_call.1} parent=1 // pred_check
      _
    $region43: #{tpu_custom_call.1} parent=1 // pred_check_branch
      %40 = sbr.rel (0) target = $region45
    $region44: #{tpu_custom_call.1} parent=1 // pred_region
      _
    $region45: #{tpu_custom_call.1} parent=1 // pred_fallthru
      _
    // Predicated region
    $region46: #{tpu_custom_call.1} parent=1 // pred_check
      _
    $region47: #{tpu_custom_call.1} parent=1 // pred_check_branch
      %42 = sbr.rel (0) target = $region49
    $region48: #{tpu_custom_call.1} parent=1 // pred_region
      _
    $region49: #{tpu_custom_call.1} parent=1 // pred_fallthru
      _
    // Predicated region
    $region50: #{tpu_custom_call.1} parent=1 // pred_check
      _
    $region51: #{tpu_custom_call.1} parent=1 // pred_check_branch
      %44 = sbr.rel (0) target = $region53
    $region52: #{tpu_custom_call.1} parent=1 // pred_region
      _
    $region53: #{tpu_custom_call.1} parent=1 // pred_fallthru
      _
    %v45 = vld [vmem:[%s0] sm:$0xff]
    %v46 = vld [vmem:[%s0 + $0x8] sm:$0xff]
    %v47 = vld [vmem:[%s1] sm:$0x1]
    %v48 = vld [vmem:[%s2] sm:$0x1]
    %vm49 = vcmask 261120
    %v50 = vsel %vm49, %v45, 0.0
    %51 = vadd.xlane.f32.xlu0 %v50
    %v52 = vpop.xlane.xlu0 %51
    %v53 = vsel %vm49, %v46, 0.0
    %54 = vadd.xlane.f32.xlu0 %v53
    %v55 = vpop.xlane.xlu0 %54
    %v56 = vrcp.pop 32.0
    %v57 = vmul.f32 %v52, %v56
    %v58 = vmul.f32 %v55, %v56
    %v59 = vsub.f32 %v45, %v57
    %v60 = vsub.f32 %v46, %v58
    %v61 = vmul.f32 %v59, %v59
    %v62 = vmul.f32 %v60, %v60
    %v63 = vsel %vm49, %v61, 0.0
    %64 = vadd.xlane.f32.xlu0 %v63
    %v65 = vpop.xlane.xlu0 %64
    %v66 = vsel %vm49, %v62, 0.0
    %67 = vadd.xlane.f32.xlu0 %v66
    %v68 = vpop.xlane.xlu0 %67
    %v69 = vmul.f32 %v65, %v56
    %v70 = vmul.f32 %v68, %v56
    %v71 = vadd.f32 %v69, 1e-05
    %v72 = vadd.f32 %v70, 1e-05
    %v73 = vrsqrt.pop %v71
    %v74 = vrsqrt.pop %v72
    %v75 = vmul.f32 %v59, %v73
    %v76 = vmul.f32 %v60, %v74
    %v78 = vlaneseq
    %v79 = vshrl.u32 %v78, 7
    %v80 = vsub.s32 0, %v79
    %v81 = vrot.slane %v47, %v80
    %v83 = vmul.f32 %v75, %v81
    %v84 = vmul.f32 %v76, %v81
    %v86 = vlaneseq
    %v87 = vshrl.u32 %v86, 7
    %v88 = vsub.s32 0, %v87
    %v89 = vrot.slane %v48, %v88
    %v91 = vadd.f32 %v83, %v89
    %v92 = vadd.f32 %v84, %v89
    %v93 = vld [vmem:[%s3] sm:$0xff]
    %v94 = vld [vmem:[%s3 + $0x8] sm:$0xff]
    %v95 = vld [vmem:[%s3 + $0x10] sm:$0xff]
    %v96 = vld [vmem:[%s3 + $0x18] sm:$0xff]
    %v97 = vld [vmem:[%s4] sm:$0x1]
    %v99 = vlaneseq
    %v100 = vshrl.u32 %v99, 7
    %v101 = vsub.s32 0, %v100
    %v102 = vrot.slane %v97, %v101
    %v105 = vsel %vm49, %v91, 0
    %v108 = vsel %vm49, %v92, 0
    %110 = vmatprep.subr.mxu0 0.0
    %111 = vmatpush1.msra.mxu0 %v93
    %112 = vmatprep.subr.mxu0 0.0
    %113 = vmatpush1.msra.mxu0 %v94
    %114 = vmatprep.subr.mxu0 0.0
    %115 = vmatpush1.msra.mxu0 %v95
    %116 = vmatprep.subr.mxu0 0.0
    %117 = vmatpush1.msra.mxu0 %v96
    %118 = vmatprep.subr.mxu0 0.0
    %119 = vmatpush1.msra.mxu0 0.0
    %120 = vmatprep.subr.mxu0 0.0
    %121 = vmatpush1.msra.mxu0 0.0
    %122 = vmatprep.subr.mxu0 0.0
    %123 = vmatpush1.msra.mxu0 0.0
    %124 = vmatprep.subr.mxu0 0.0
    %125 = vmatpush1.msra.mxu0 0.0
    %126 = vmatprep.subr.mxu0 0.0
    %127 = vmatpush1.msra.mxu0 0.0
    %128 = vmatprep.subr.mxu0 0.0
    %129 = vmatpush1.msra.mxu0 0.0
    %130 = vmatprep.subr.mxu0 0.0
    %131 = vmatpush1.msra.mxu0 0.0
    %132 = vmatprep.subr.mxu0 0.0
    %133 = vmatpush1.msra.mxu0 0.0
    %134 = vmatprep.subr.mxu0 0.0
    %135 = vmatpush1.msra.mxu0 0.0
    %136 = vmatprep.subr.mxu0 0.0
    %137 = vmatpush1.msra.mxu0 0.0
    %138 = vmatprep.subr.mxu0 0.0
    %139 = vmatpush1.msra.mxu0 0.0
    %140 = vmatprep.subr.mxu0 0.0
    %141 = vmatpush1.msra.mxu0 0.0
    %142 = vmatprep.subr.mxu0 0.0
    %143 = vmatpush1.msra.mxu0 0.0
    %144 = vmatprep.subr.mxu0 0.0
    %145 = vmatpush1.msra.mxu0 0.0
    %146 = vmatprep.subr.mxu0 0.0
    %147 = vmatpush1.msra.mxu0 0.0
    %148 = vmatprep.subr.mxu0 0.0
    %149 = vmatpush1.msra.mxu0 0.0
    %150 = vmatprep.subr.mxu0 0.0
    %151 = vmatpush1.msra.mxu0 0.0
    %152 = vmatprep.subr.mxu0 0.0
    %153 = vmatpush1.msra.mxu0 0.0
    %154 = vmatprep.subr.mxu0 0.0
    %155 = vmatpush1.msra.mxu0 0.0
    %156 = vmatprep.subr.mxu0 0.0
    %157 = vmatpush1.msra.mxu0 0.0
    %158 = vmatprep.subr.mxu0 0.0
    %159 = vmatpush1.msra.mxu0 0.0
    %160 = vmatprep.subr.mxu0 0.0
    %161 = vmatpush1.msra.mxu0 0.0
    %162 = vmatprep.subr.mxu0 0.0
    %163 = vmatpush1.msra.mxu0 0.0
    %164 = vmatprep.subr.mxu0 0.0
    %165 = vmatpush1.msra.mxu0 0.0
    %166 = vmatprep.subr.mxu0 0.0
    %167 = vmatpush1.msra.mxu0 0.0
    %168 = vmatprep.subr.mxu0 0.0
    %169 = vmatpush1.msra.mxu0 0.0
    %170 = vmatprep.subr.mxu0 0.0
    %171 = vmatpush1.msra.mxu0 0.0
    %172 = vmatprep.subr.mxu0 0.0
    %173 = vmatpush1.msra.mxu0 0.0
    %174 = vmatprep.mubr.f32.mxu0 0.0
    %175 = vmatmul.mubr.f32.gmra.mrb[0].mxu0 %v105
    %v176 = vpop.f32.mrb[0].mxu0
    %v177 = vadd.f32 %v102, %v176
    %v178 = vpop.f32.mrb[0].mxu0
    %179 = vmatprep.mubr.f32.mxu0 0.0
    %180 = vmatmul.mubr.f32.gmra.mrb[0].mxu0 %v108
    %v181 = vpop.f32.mrb[0].mxu0
    %v182 = vadd.f32 %v102, %v181
    %v183 = vpop.f32.mrb[0].mxu0
    %184 = vdwg.mxu0
    %v185 = vlaneseq
    %v186 = vshrl.u32 %v185, 7
    %v187 = vlaneseq
    %v188 = vand.u32 %v187, 127
    %vm189 = vcmp.ge.s32.totalorder %v186, %v188
    %v190 = vsel %vm189, 0.0, -1e+30
    %v191 = vld [vmem:[%s5] sm:$0xff]
    %v192 = vld [vmem:[%s5 + $0x8] sm:$0xff]
    %v193 = vld [vmem:[%s5 + $0x10] sm:$0xff]
    %v194 = vld [vmem:[%s5 + $0x18] sm:$0xff]
    %v195 = vmul.f32 %v177, 0.35355338
    %v196 = vmul.f32 %v182, 0.35355338
    %198 = vrot.lane.b32.xlu0 %v177, 96
    %v199 = vpop.permute.xlu0 %198
    %vm200 = vcmask 64512
    %v202 = vsel %vm200, %v195, 0
    %v204 = vsel %vm200, %v199, 0
    %206 = vmatprep.subr.mxu0 0.0
    %207 = vmatpush1.xpose.msra.mxu0 %v204
    %208 = vmatprep.subr.mxu0 0.0
    %209 = vmatpush1.xpose.msra.mxu0 0.0
    %210 = vmatprep.subr.mxu0 0.0
    %211 = vmatpush1.xpose.msra.mxu0 0.0
    %212 = vmatprep.subr.mxu0 0.0
    %213 = vmatpush1.xpose.msra.mxu0 0.0
    %214 = vmatprep.subr.mxu0 0.0
    %215 = vmatpush1.xpose.msra.mxu0 0.0
    %216 = vmatprep.subr.mxu0 0.0
    %217 = vmatpush1.xpose.msra.mxu0 0.0
    %218 = vmatprep.subr.mxu0 0.0
    %219 = vmatpush1.xpose.msra.mxu0 0.0
    %220 = vmatprep.subr.mxu0 0.0
    %221 = vmatpush1.xpose.msra.mxu0 0.0
    %222 = vmatprep.subr.mxu0 0.0
    %223 = vmatpush1.xpose.msra.mxu0 0.0
    %224 = vmatprep.subr.mxu0 0.0
    %225 = vmatpush1.xpose.msra.mxu0 0.0
    %226 = vmatprep.subr.mxu0 0.0
    %227 = vmatpush1.xpose.msra.mxu0 0.0
    %228 = vmatprep.subr.mxu0 0.0
    %229 = vmatpush1.xpose.msra.mxu0 0.0
    %230 = vmatprep.subr.mxu0 0.0
    %231 = vmatpush1.xpose.msra.mxu0 0.0
    %232 = vmatprep.subr.mxu0 0.0
    %233 = vmatpush1.xpose.msra.mxu0 0.0
    %234 = vmatprep.subr.mxu0 0.0
    %235 = vmatpush1.xpose.msra.mxu0 0.0
    %236 = vmatprep.subr.mxu0 0.0
    %237 = vmatpush1.xpose.msra.mxu0 0.0
    %238 = vmatprep.subr.mxu0 0.0
    %239 = vmatpush1.xpose.msra.mxu0 0.0
    %240 = vmatprep.subr.mxu0 0.0
    %241 = vmatpush1.xpose.msra.mxu0 0.0
    %242 = vmatprep.subr.mxu0 0.0
    %243 = vmatpush1.xpose.msra.mxu0 0.0
    %244 = vmatprep.subr.mxu0 0.0
    %245 = vmatpush1.xpose.msra.mxu0 0.0
    %246 = vmatprep.subr.mxu0 0.0
    %247 = vmatpush1.xpose.msra.mxu0 0.0
    %248 = vmatprep.subr.mxu0 0.0
    %249 = vmatpush1.xpose.msra.mxu0 0.0
    %250 = vmatprep.subr.mxu0 0.0
    %251 = vmatpush1.xpose.msra.mxu0 0.0
    %252 = vmatprep.subr.mxu0 0.0
    %253 = vmatpush1.xpose.msra.mxu0 0.0
    %254 = vmatprep.subr.mxu0 0.0
    %255 = vmatpush1.xpose.msra.mxu0 0.0
    %256 = vmatprep.subr.mxu0 0.0
    %257 = vmatpush1.xpose.msra.mxu0 0.0
    %258 = vmatprep.subr.mxu0 0.0
    %259 = vmatpush1.xpose.msra.mxu0 0.0
    %260 = vmatprep.subr.mxu0 0.0
    %261 = vmatpush1.xpose.msra.mxu0 0.0
    %262 = vmatprep.subr.mxu0 0.0
    %263 = vmatpush1.xpose.msra.mxu0 0.0
    %264 = vmatprep.subr.mxu0 0.0
    %265 = vmatpush1.xpose.msra.mxu0 0.0
    %266 = vmatprep.subr.mxu0 0.0
    %267 = vmatpush1.xpose.msra.mxu0 0.0
    %268 = vmatprep.subr.mxu0 0.0
    %269 = vmatpush1.xpose.msra.mxu0 0.0
    %270 = vmatprep.mubr.f32.mxu0 0.0
    %271 = vmatmul.mubr.f32.gmra.mrb[0].mxu0 %v202
    %v272 = vpop.f32.mrb[0].mxu0
    %v273 = vadd.f32 %v190, %v272
    %v274 = vpop.f32.mrb[0].mxu0
    %275 = vdwg.mxu0
    %277 = vrot.lane.b32.xlu0 %v182, 96
    %v278 = vpop.permute.xlu0 %277
    %v280 = vsel %vm200, %v196, 0
    %v282 = vsel %vm200, %v278, 0
    %284 = vmatprep.subr.mxu0 0.0
    %285 = vmatpush1.xpose.msra.mxu0 %v282
    %286 = vmatprep.subr.mxu0 0.0
    %287 = vmatpush1.xpose.msra.mxu0 0.0
    %288 = vmatprep.subr.mxu0 0.0
    %289 = vmatpush1.xpose.msra.mxu0 0.0
    %290 = vmatprep.subr.mxu0 0.0
    %291 = vmatpush1.xpose.msra.mxu0 0.0
    %292 = vmatprep.subr.mxu0 0.0
    %293 = vmatpush1.xpose.msra.mxu0 0.0
    %294 = vmatprep.subr.mxu0 0.0
    %295 = vmatpush1.xpose.msra.mxu0 0.0
    %296 = vmatprep.subr.mxu0 0.0
    %297 = vmatpush1.xpose.msra.mxu0 0.0
    %298 = vmatprep.subr.mxu0 0.0
    %299 = vmatpush1.xpose.msra.mxu0 0.0
    %300 = vmatprep.subr.mxu0 0.0
    %301 = vmatpush1.xpose.msra.mxu0 0.0
    %302 = vmatprep.subr.mxu0 0.0
    %303 = vmatpush1.xpose.msra.mxu0 0.0
    %304 = vmatprep.subr.mxu0 0.0
    %305 = vmatpush1.xpose.msra.mxu0 0.0
    %306 = vmatprep.subr.mxu0 0.0
    %307 = vmatpush1.xpose.msra.mxu0 0.0
    %308 = vmatprep.subr.mxu0 0.0
    %309 = vmatpush1.xpose.msra.mxu0 0.0
    %310 = vmatprep.subr.mxu0 0.0
    %311 = vmatpush1.xpose.msra.mxu0 0.0
    %312 = vmatprep.subr.mxu0 0.0
    %313 = vmatpush1.xpose.msra.mxu0 0.0
    %314 = vmatprep.subr.mxu0 0.0
    %315 = vmatpush1.xpose.msra.mxu0 0.0
    %316 = vmatprep.subr.mxu0 0.0
    %317 = vmatpush1.xpose.msra.mxu0 0.0
    %318 = vmatprep.subr.mxu0 0.0
    %319 = vmatpush1.xpose.msra.mxu0 0.0
    %320 = vmatprep.subr.mxu0 0.0
    %321 = vmatpush1.xpose.msra.mxu0 0.0
    %322 = vmatprep.subr.mxu0 0.0
    %323 = vmatpush1.xpose.msra.mxu0 0.0
    %324 = vmatprep.subr.mxu0 0.0
    %325 = vmatpush1.xpose.msra.mxu0 0.0
    %326 = vmatprep.subr.mxu0 0.0
    %327 = vmatpush1.xpose.msra.mxu0 0.0
    %328 = vmatprep.subr.mxu0 0.0
    %329 = vmatpush1.xpose.msra.mxu0 0.0
    %330 = vmatprep.subr.mxu0 0.0
    %331 = vmatpush1.xpose.msra.mxu0 0.0
    %332 = vmatprep.subr.mxu0 0.0
    %333 = vmatpush1.xpose.msra.mxu0 0.0
    %334 = vmatprep.subr.mxu0 0.0
    %335 = vmatpush1.xpose.msra.mxu0 0.0
    %336 = vmatprep.subr.mxu0 0.0
    %337 = vmatpush1.xpose.msra.mxu0 0.0
    %338 = vmatprep.subr.mxu0 0.0
    %339 = vmatpush1.xpose.msra.mxu0 0.0
    %340 = vmatprep.subr.mxu0 0.0
    %341 = vmatpush1.xpose.msra.mxu0 0.0
    %342 = vmatprep.subr.mxu0 0.0
    %343 = vmatpush1.xpose.msra.mxu0 0.0
    %344 = vmatprep.subr.mxu0 0.0
    %345 = vmatpush1.xpose.msra.mxu0 0.0
    %346 = vmatprep.subr.mxu0 0.0
    %347 = vmatpush1.xpose.msra.mxu0 0.0
    %348 = vmatprep.mubr.f32.mxu0 0.0
    %349 = vmatmul.mubr.f32.gmra.mrb[0].mxu0 %v280
    %v350 = vpop.f32.mrb[0].mxu0
    %v351 = vadd.f32 %v190, %v350
    %v352 = vpop.f32.mrb[0].mxu0
    %353 = vdwg.mxu0
    %v354 = vsel %vm200, %v273, -inf
    %355 = vmax.xlane.f32.xlu0 %v354
    %v356 = vpop.xlane.xlu0 %355
    %v357 = vsel %vm200, %v351, -inf
    %358 = vmax.xlane.f32.xlu0 %v357
    %v359 = vpop.xlane.xlu0 %358
    %v360 = vsub.f32 %v273, %v356
    %v361 = vsub.f32 %v351, %v359
    %v362 = vmul.f32 %v360, 1.442695
    %v363 = vpow.pop %v362
    %v364 = vmul.f32 %v361, 1.442695
    %v365 = vpow.pop %v364
    %v366 = vsel %vm200, %v363, 0.0
    %367 = vadd.xlane.f32.xlu0 %v366
    %v368 = vpop.xlane.xlu0 %367
    %v369 = vsel %vm200, %v365, 0.0
    %370 = vadd.xlane.f32.xlu0 %v369
    %v371 = vpop.xlane.xlu0 %370
    %v372 = vrcp.pop %v368
    %v373 = vrcp.pop %v371
    %v374 = vmul.f32 %v363, %v372
    %v375 = vmul.f32 %v365, %v373
    %376 = vrot.lane.b32.xlu0 %v177, 64
    %v377 = vpop.permute.xlu0 %376
    %v380 = vsel %vm200, %v374, 0
    %382 = vmatprep.subr.mxu0 0.0
    %383 = vmatpush1.msra.mxu0 %v377
    %384 = vmatprep.subr.mxu0 0.0
    %385 = vmatpush1.msra.mxu0 0.0
    %386 = vmatprep.subr.mxu0 0.0
    %387 = vmatpush1.msra.mxu0 0.0
    %388 = vmatprep.subr.mxu0 0.0
    %389 = vmatpush1.msra.mxu0 0.0
    %390 = vmatprep.subr.mxu0 0.0
    %391 = vmatpush1.msra.mxu0 0.0
    %392 = vmatprep.subr.mxu0 0.0
    %393 = vmatpush1.msra.mxu0 0.0
    %394 = vmatprep.subr.mxu0 0.0
    %395 = vmatpush1.msra.mxu0 0.0
    %396 = vmatprep.subr.mxu0 0.0
    %397 = vmatpush1.msra.mxu0 0.0
    %398 = vmatprep.subr.mxu0 0.0
    %399 = vmatpush1.msra.mxu0 0.0
    %400 = vmatprep.subr.mxu0 0.0
    %401 = vmatpush1.msra.mxu0 0.0
    %402 = vmatprep.subr.mxu0 0.0
    %403 = vmatpush1.msra.mxu0 0.0
    %404 = vmatprep.subr.mxu0 0.0
    %405 = vmatpush1.msra.mxu0 0.0
    %406 = vmatprep.subr.mxu0 0.0
    %407 = vmatpush1.msra.mxu0 0.0
    %408 = vmatprep.subr.mxu0 0.0
    %409 = vmatpush1.msra.mxu0 0.0
    %410 = vmatprep.subr.mxu0 0.0
    %411 = vmatpush1.msra.mxu0 0.0
    %412 = vmatprep.subr.mxu0 0.0
    %413 = vmatpush1.msra.mxu0 0.0
    %414 = vmatprep.subr.mxu0 0.0
    %415 = vmatpush1.msra.mxu0 0.0
    %416 = vmatprep.subr.mxu0 0.0
    %417 = vmatpush1.msra.mxu0 0.0
    %418 = vmatprep.subr.mxu0 0.0
    %419 = vmatpush1.msra.mxu0 0.0
    %420 = vmatprep.subr.mxu0 0.0
    %421 = vmatpush1.msra.mxu0 0.0
    %422 = vmatprep.subr.mxu0 0.0
    %423 = vmatpush1.msra.mxu0 0.0
    %424 = vmatprep.subr.mxu0 0.0
    %425 = vmatpush1.msra.mxu0 0.0
    %426 = vmatprep.subr.mxu0 0.0
    %427 = vmatpush1.msra.mxu0 0.0
    %428 = vmatprep.subr.mxu0 0.0
    %429 = vmatpush1.msra.mxu0 0.0
    %430 = vmatprep.subr.mxu0 0.0
    %431 = vmatpush1.msra.mxu0 0.0
    %432 = vmatprep.subr.mxu0 0.0
    %433 = vmatpush1.msra.mxu0 0.0
    %434 = vmatprep.subr.mxu0 0.0
    %435 = vmatpush1.msra.mxu0 0.0
    %436 = vmatprep.subr.mxu0 0.0
    %437 = vmatpush1.msra.mxu0 0.0
    %438 = vmatprep.subr.mxu0 0.0
    %439 = vmatpush1.msra.mxu0 0.0
    %440 = vmatprep.subr.mxu0 0.0
    %441 = vmatpush1.msra.mxu0 0.0
    %442 = vmatprep.subr.mxu0 0.0
    %443 = vmatpush1.msra.mxu0 0.0
    %444 = vmatprep.subr.mxu0 0.0
    %445 = vmatpush1.msra.mxu0 0.0
    %446 = vmatprep.mubr.f32.mxu0 0.0
    %447 = vmatmul.mubr.f32.gmra.mrb[0].mxu0 %v380
    %v448 = vpop.f32.mrb[0].mxu0
    %v449 = vadd.f32 0.0, %v448
    %v450 = vpop.f32.mrb[0].mxu0
    %451 = vdwg.mxu0
    %452 = vrot.lane.b32.xlu0 %v182, 64
    %v453 = vpop.permute.xlu0 %452
    %v456 = vsel %vm200, %v375, 0
    %458 = vmatprep.subr.mxu0 0.0
    %459 = vmatpush1.msra.mxu0 %v453
    %460 = vmatprep.subr.mxu0 0.0
    %461 = vmatpush1.msra.mxu0 0.0
    %462 = vmatprep.subr.mxu0 0.0
    %463 = vmatpush1.msra.mxu0 0.0
    %464 = vmatprep.subr.mxu0 0.0
    %465 = vmatpush1.msra.mxu0 0.0
    %466 = vmatprep.subr.mxu0 0.0
    %467 = vmatpush1.msra.mxu0 0.0
    %468 = vmatprep.subr.mxu0 0.0
    %469 = vmatpush1.msra.mxu0 0.0
    %470 = vmatprep.subr.mxu0 0.0
    %471 = vmatpush1.msra.mxu0 0.0
    %472 = vmatprep.subr.mxu0 0.0
    %473 = vmatpush1.msra.mxu0 0.0
    %474 = vmatprep.subr.mxu0 0.0
    %475 = vmatpush1.msra.mxu0 0.0
    %476 = vmatprep.subr.mxu0 0.0
    %477 = vmatpush1.msra.mxu0 0.0
    %478 = vmatprep.subr.mxu0 0.0
    %479 = vmatpush1.msra.mxu0 0.0
    %480 = vmatprep.subr.mxu0 0.0
    %481 = vmatpush1.msra.mxu0 0.0
    %482 = vmatprep.subr.mxu0 0.0
    %483 = vmatpush1.msra.mxu0 0.0
    %484 = vmatprep.subr.mxu0 0.0
    %485 = vmatpush1.msra.mxu0 0.0
    %486 = vmatprep.subr.mxu0 0.0
    %487 = vmatpush1.msra.mxu0 0.0
    %488 = vmatprep.subr.mxu0 0.0
    %489 = vmatpush1.msra.mxu0 0.0
    %490 = vmatprep.subr.mxu0 0.0
    %491 = vmatpush1.msra.mxu0 0.0
    %492 = vmatprep.subr.mxu0 0.0
    %493 = vmatpush1.msra.mxu0 0.0
    %494 = vmatprep.subr.mxu0 0.0
    %495 = vmatpush1.msra.mxu0 0.0
    %496 = vmatprep.subr.mxu0 0.0
    %497 = vmatpush1.msra.mxu0 0.0
    %498 = vmatprep.subr.mxu0 0.0
    %499 = vmatpush1.msra.mxu0 0.0
    %500 = vmatprep.subr.mxu0 0.0
    %501 = vmatpush1.msra.mxu0 0.0
    %502 = vmatprep.subr.mxu0 0.0
    %503 = vmatpush1.msra.mxu0 0.0
    %504 = vmatprep.subr.mxu0 0.0
    %505 = vmatpush1.msra.mxu0 0.0
    %506 = vmatprep.subr.mxu0 0.0
    %507 = vmatpush1.msra.mxu0 0.0
    %508 = vmatprep.subr.mxu0 0.0
    %509 = vmatpush1.msra.mxu0 0.0
    %510 = vmatprep.subr.mxu0 0.0
    %511 = vmatpush1.msra.mxu0 0.0
    %512 = vmatprep.subr.mxu0 0.0
    %513 = vmatpush1.msra.mxu0 0.0
    %514 = vmatprep.subr.mxu0 0.0
    %515 = vmatpush1.msra.mxu0 0.0
    %516 = vmatprep.subr.mxu0 0.0
    %517 = vmatpush1.msra.mxu0 0.0
    %518 = vmatprep.subr.mxu0 0.0
    %519 = vmatpush1.msra.mxu0 0.0
    %520 = vmatprep.subr.mxu0 0.0
    %521 = vmatpush1.msra.mxu0 0.0
    %522 = vmatprep.mubr.f32.mxu0 0.0
    %523 = vmatmul.mubr.f32.gmra.mrb[0].mxu0 %v456
    %v524 = vpop.f32.mrb[0].mxu0
    %v525 = vadd.f32 0.0, %v524
    %v526 = vpop.f32.mrb[0].mxu0
    %527 = vdwg.mxu0
    %528 = vrot.lane.b32.xlu0 %v195, 120
    %v529 = vpop.permute.xlu0 %528
    %530 = vrot.lane.b32.xlu0 %v177, 88
    %v531 = vpop.permute.xlu0 %530
    %v532 = vsel %vm200, %v529, 0
    %v534 = vsel %vm200, %v531, 0
    %536 = vmatprep.subr.mxu0 0.0
    %537 = vmatpush1.xpose.msra.mxu0 %v534
    %538 = vmatprep.subr.mxu0 0.0
    %539 = vmatpush1.xpose.msra.mxu0 0.0
    %540 = vmatprep.subr.mxu0 0.0
    %541 = vmatpush1.xpose.msra.mxu0 0.0
    %542 = vmatprep.subr.mxu0 0.0
    %543 = vmatpush1.xpose.msra.mxu0 0.0
    %544 = vmatprep.subr.mxu0 0.0
    %545 = vmatpush1.xpose.msra.mxu0 0.0
    %546 = vmatprep.subr.mxu0 0.0
    %547 = vmatpush1.xpose.msra.mxu0 0.0
    %548 = vmatprep.subr.mxu0 0.0
    %549 = vmatpush1.xpose.msra.mxu0 0.0
    %550 = vmatprep.subr.mxu0 0.0
    %551 = vmatpush1.xpose.msra.mxu0 0.0
    %552 = vmatprep.subr.mxu0 0.0
    %553 = vmatpush1.xpose.msra.mxu0 0.0
    %554 = vmatprep.subr.mxu0 0.0
    %555 = vmatpush1.xpose.msra.mxu0 0.0
    %556 = vmatprep.subr.mxu0 0.0
    %557 = vmatpush1.xpose.msra.mxu0 0.0
    %558 = vmatprep.subr.mxu0 0.0
    %559 = vmatpush1.xpose.msra.mxu0 0.0
    %560 = vmatprep.subr.mxu0 0.0
    %561 = vmatpush1.xpose.msra.mxu0 0.0
    %562 = vmatprep.subr.mxu0 0.0
    %563 = vmatpush1.xpose.msra.mxu0 0.0
    %564 = vmatprep.subr.mxu0 0.0
    %565 = vmatpush1.xpose.msra.mxu0 0.0
    %566 = vmatprep.subr.mxu0 0.0
    %567 = vmatpush1.xpose.msra.mxu0 0.0
    %568 = vmatprep.subr.mxu0 0.0
    %569 = vmatpush1.xpose.msra.mxu0 0.0
    %570 = vmatprep.subr.mxu0 0.0
    %571 = vmatpush1.xpose.msra.mxu0 0.0
    %572 = vmatprep.subr.mxu0 0.0
    %573 = vmatpush1.xpose.msra.mxu0 0.0
    %574 = vmatprep.subr.mxu0 0.0
    %575 = vmatpush1.xpose.msra.mxu0 0.0
    %576 = vmatprep.subr.mxu0 0.0
    %577 = vmatpush1.xpose.msra.mxu0 0.0
    %578 = vmatprep.subr.mxu0 0.0
    %579 = vmatpush1.xpose.msra.mxu0 0.0
    %580 = vmatprep.subr.mxu0 0.0
    %581 = vmatpush1.xpose.msra.mxu0 0.0
    %582 = vmatprep.subr.mxu0 0.0
    %583 = vmatpush1.xpose.msra.mxu0 0.0
    %584 = vmatprep.subr.mxu0 0.0
    %585 = vmatpush1.xpose.msra.mxu0 0.0
    %586 = vmatprep.subr.mxu0 0.0
    %587 = vmatpush1.xpose.msra.mxu0 0.0
    %588 = vmatprep.subr.mxu0 0.0
    %589 = vmatpush1.xpose.msra.mxu0 0.0
    %590 = vmatprep.subr.mxu0 0.0
    %591 = vmatpush1.xpose.msra.mxu0 0.0
    %592 = vmatprep.subr.mxu0 0.0
    %593 = vmatpush1.xpose.msra.mxu0 0.0
    %594 = vmatprep.subr.mxu0 0.0
    %595 = vmatpush1.xpose.msra.mxu0 0.0
    %596 = vmatprep.subr.mxu0 0.0
    %597 = vmatpush1.xpose.msra.mxu0 0.0
    %598 = vmatprep.subr.mxu0 0.0
    %599 = vmatpush1.xpose.msra.mxu0 0.0
    %600 = vmatprep.mubr.f32.mxu0 0.0
    %601 = vmatmul.mubr.f32.gmra.mrb[0].mxu0 %v532
    %v602 = vpop.f32.mrb[0].mxu0
    %v603 = vadd.f32 %v190, %v602
    %v604 = vpop.f32.mrb[0].mxu0
    %605 = vdwg.mxu0
    %606 = vrot.lane.b32.xlu0 %v196, 120
    %v607 = vpop.permute.xlu0 %606
    %608 = vrot.lane.b32.xlu0 %v182, 88
    %v609 = vpop.permute.xlu0 %608
    %v610 = vsel %vm200, %v607, 0
    %v612 = vsel %vm200, %v609, 0
    %614 = vmatprep.subr.mxu0 0.0
    %615 = vmatpush1.xpose.msra.mxu0 %v612
    %616 = vmatprep.subr.mxu0 0.0
    %617 = vmatpush1.xpose.msra.mxu0 0.0
    %618 = vmatprep.subr.mxu0 0.0
    %619 = vmatpush1.xpose.msra.mxu0 0.0
    %620 = vmatprep.subr.mxu0 0.0
    %621 = vmatpush1.xpose.msra.mxu0 0.0
    %622 = vmatprep.subr.mxu0 0.0
    %623 = vmatpush1.xpose.msra.mxu0 0.0
    %624 = vmatprep.subr.mxu0 0.0
    %625 = vmatpush1.xpose.msra.mxu0 0.0
    %626 = vmatprep.subr.mxu0 0.0
    %627 = vmatpush1.xpose.msra.mxu0 0.0
    %628 = vmatprep.subr.mxu0 0.0
    %629 = vmatpush1.xpose.msra.mxu0 0.0
    %630 = vmatprep.subr.mxu0 0.0
    %631 = vmatpush1.xpose.msra.mxu0 0.0
    %632 = vmatprep.subr.mxu0 0.0
    %633 = vmatpush1.xpose.msra.mxu0 0.0
    %634 = vmatprep.subr.mxu0 0.0
    %635 = vmatpush1.xpose.msra.mxu0 0.0
    %636 = vmatprep.subr.mxu0 0.0
    %637 = vmatpush1.xpose.msra.mxu0 0.0
    %638 = vmatprep.subr.mxu0 0.0
    %639 = vmatpush1.xpose.msra.mxu0 0.0
    %640 = vmatprep.subr.mxu0 0.0
    %641 = vmatpush1.xpose.msra.mxu0 0.0
    %642 = vmatprep.subr.mxu0 0.0
    %643 = vmatpush1.xpose.msra.mxu0 0.0
    %644 = vmatprep.subr.mxu0 0.0
    %645 = vmatpush1.xpose.msra.mxu0 0.0
    %646 = vmatprep.subr.mxu0 0.0
    %647 = vmatpush1.xpose.msra.mxu0 0.0
    %648 = vmatprep.subr.mxu0 0.0
    %649 = vmatpush1.xpose.msra.mxu0 0.0
    %650 = vmatprep.subr.mxu0 0.0
    %651 = vmatpush1.xpose.msra.mxu0 0.0
    %652 = vmatprep.subr.mxu0 0.0
    %653 = vmatpush1.xpose.msra.mxu0 0.0
    %654 = vmatprep.subr.mxu0 0.0
    %655 = vmatpush1.xpose.msra.mxu0 0.0
    %656 = vmatprep.subr.mxu0 0.0
    %657 = vmatpush1.xpose.msra.mxu0 0.0
    %658 = vmatprep.subr.mxu0 0.0
    %659 = vmatpush1.xpose.msra.mxu0 0.0
    %660 = vmatprep.subr.mxu0 0.0
    %661 = vmatpush1.xpose.msra.mxu0 0.0
    %662 = vmatprep.subr.mxu0 0.0
    %663 = vmatpush1.xpose.msra.mxu0 0.0
    %664 = vmatprep.subr.mxu0 0.0
    %665 = vmatpush1.xpose.msra.mxu0 0.0
    %666 = vmatprep.subr.mxu0 0.0
    %667 = vmatpush1.xpose.msra.mxu0 0.0
    %668 = vmatprep.subr.mxu0 0.0
    %669 = vmatpush1.xpose.msra.mxu0 0.0
    %670 = vmatprep.subr.mxu0 0.0
    %671 = vmatpush1.xpose.msra.mxu0 0.0
    %672 = vmatprep.subr.mxu0 0.0
    %673 = vmatpush1.xpose.msra.mxu0 0.0
    %674 = vmatprep.subr.mxu0 0.0
    %675 = vmatpush1.xpose.msra.mxu0 0.0
    %676 = vmatprep.subr.mxu0 0.0
    %677 = vmatpush1.xpose.msra.mxu0 0.0
    %678 = vmatprep.mubr.f32.mxu0 0.0
    %679 = vmatmul.mubr.f32.gmra.mrb[0].mxu0 %v610
    %v680 = vpop.f32.mrb[0].mxu0
    %v681 = vadd.f32 %v190, %v680
    %v682 = vpop.f32.mrb[0].mxu0
    %683 = vdwg.mxu0
    %v684 = vsel %vm200, %v603, -inf
    %685 = vmax.xlane.f32.xlu0 %v684
    %v686 = vpop.xlane.xlu0 %685
    %v687 = vsel %vm200, %v681, -inf
    %688 = vmax.xlane.f32.xlu0 %v687
    %v689 = vpop.xlane.xlu0 %688
    %v690 = vsub.f32 %v603, %v686
    %v691 = vsub.f32 %v681, %v689
    %v692 = vmul.f32 %v690, 1.442695
    %v693 = vpow.pop %v692
    %v694 = vmul.f32 %v691, 1.442695
    %v695 = vpow.pop %v694
    %v696 = vsel %vm200, %v693, 0.0
    %697 = vadd.xlane.f32.xlu0 %v696
    %v698 = vpop.xlane.xlu0 %697
    %v699 = vsel %vm200, %v695, 0.0
    %700 = vadd.xlane.f32.xlu0 %v699
    %v701 = vpop.xlane.xlu0 %700
    %v702 = vrcp.pop %v698
    %v703 = vrcp.pop %v701
    %v704 = vmul.f32 %v693, %v702
    %v705 = vmul.f32 %v695, %v703
    %706 = vrot.lane.b32.xlu0 %v177, 56
    %v707 = vpop.permute.xlu0 %706
    %v710 = vsel %vm200, %v704, 0
    %712 = vmatprep.subr.mxu0 0.0
    %713 = vmatpush1.msra.mxu0 %v707
    %714 = vmatprep.subr.mxu0 0.0
    %715 = vmatpush1.msra.mxu0 0.0
    %716 = vmatprep.subr.mxu0 0.0
    %717 = vmatpush1.msra.mxu0 0.0
    %718 = vmatprep.subr.mxu0 0.0
    %719 = vmatpush1.msra.mxu0 0.0
    %720 = vmatprep.subr.mxu0 0.0
    %721 = vmatpush1.msra.mxu0 0.0
    %722 = vmatprep.subr.mxu0 0.0
    %723 = vmatpush1.msra.mxu0 0.0
    %724 = vmatprep.subr.mxu0 0.0
    %725 = vmatpush1.msra.mxu0 0.0
    %726 = vmatprep.subr.mxu0 0.0
    %727 = vmatpush1.msra.mxu0 0.0
    %728 = vmatprep.subr.mxu0 0.0
    %729 = vmatpush1.msra.mxu0 0.0
    %730 = vmatprep.subr.mxu0 0.0
    %731 = vmatpush1.msra.mxu0 0.0
    %732 = vmatprep.subr.mxu0 0.0
    %733 = vmatpush1.msra.mxu0 0.0
    %734 = vmatprep.subr.mxu0 0.0
    %735 = vmatpush1.msra.mxu0 0.0
    %736 = vmatprep.subr.mxu0 0.0
    %737 = vmatpush1.msra.mxu0 0.0
    %738 = vmatprep.subr.mxu0 0.0
    %739 = vmatpush1.msra.mxu0 0.0
    %740 = vmatprep.subr.mxu0 0.0
    %741 = vmatpush1.msra.mxu0 0.0
    %742 = vmatprep.subr.mxu0 0.0
    %743 = vmatpush1.msra.mxu0 0.0
    %744 = vmatprep.subr.mxu0 0.0
    %745 = vmatpush1.msra.mxu0 0.0
    %746 = vmatprep.subr.mxu0 0.0
    %747 = vmatpush1.msra.mxu0 0.0
    %748 = vmatprep.subr.mxu0 0.0
    %749 = vmatpush1.msra.mxu0 0.0
    %750 = vmatprep.subr.mxu0 0.0
    %751 = vmatpush1.msra.mxu0 0.0
    %752 = vmatprep.subr.mxu0 0.0
    %753 = vmatpush1.msra.mxu0 0.0
    %754 = vmatprep.subr.mxu0 0.0
    %755 = vmatpush1.msra.mxu0 0.0
    %756 = vmatprep.subr.mxu0 0.0
    %757 = vmatpush1.msra.mxu0 0.0
    %758 = vmatprep.subr.mxu0 0.0
    %759 = vmatpush1.msra.mxu0 0.0
    %760 = vmatprep.subr.mxu0 0.0
    %761 = vmatpush1.msra.mxu0 0.0
    %762 = vmatprep.subr.mxu0 0.0
    %763 = vmatpush1.msra.mxu0 0.0
    %764 = vmatprep.subr.mxu0 0.0
    %765 = vmatpush1.msra.mxu0 0.0
    %766 = vmatprep.subr.mxu0 0.0
    %767 = vmatpush1.msra.mxu0 0.0
    %768 = vmatprep.subr.mxu0 0.0
    %769 = vmatpush1.msra.mxu0 0.0
    %770 = vmatprep.subr.mxu0 0.0
    %771 = vmatpush1.msra.mxu0 0.0
    %772 = vmatprep.subr.mxu0 0.0
    %773 = vmatpush1.msra.mxu0 0.0
    %774 = vmatprep.subr.mxu0 0.0
    %775 = vmatpush1.msra.mxu0 0.0
    %776 = vmatprep.mubr.f32.mxu0 0.0
    %777 = vmatmul.mubr.f32.gmra.mrb[0].mxu0 %v710
    %v778 = vpop.f32.mrb[0].mxu0
    %v779 = vadd.f32 0.0, %v778
    %v780 = vpop.f32.mrb[0].mxu0
    %781 = vdwg.mxu0
    %782 = vrot.lane.b32.xlu0 %v182, 56
    %v783 = vpop.permute.xlu0 %782
    %v786 = vsel %vm200, %v705, 0
    %788 = vmatprep.subr.mxu0 0.0
    %789 = vmatpush1.msra.mxu0 %v783
    %790 = vmatprep.subr.mxu0 0.0
    %791 = vmatpush1.msra.mxu0 0.0
    %792 = vmatprep.subr.mxu0 0.0
    %793 = vmatpush1.msra.mxu0 0.0
    %794 = vmatprep.subr.mxu0 0.0
    %795 = vmatpush1.msra.mxu0 0.0
    %796 = vmatprep.subr.mxu0 0.0
    %797 = vmatpush1.msra.mxu0 0.0
    %798 = vmatprep.subr.mxu0 0.0
    %799 = vmatpush1.msra.mxu0 0.0
    %800 = vmatprep.subr.mxu0 0.0
    %801 = vmatpush1.msra.mxu0 0.0
    %802 = vmatprep.subr.mxu0 0.0
    %803 = vmatpush1.msra.mxu0 0.0
    %804 = vmatprep.subr.mxu0 0.0
    %805 = vmatpush1.msra.mxu0 0.0
    %806 = vmatprep.subr.mxu0 0.0
    %807 = vmatpush1.msra.mxu0 0.0
    %808 = vmatprep.subr.mxu0 0.0
    %809 = vmatpush1.msra.mxu0 0.0
    %810 = vmatprep.subr.mxu0 0.0
    %811 = vmatpush1.msra.mxu0 0.0
    %812 = vmatprep.subr.mxu0 0.0
    %813 = vmatpush1.msra.mxu0 0.0
    %814 = vmatprep.subr.mxu0 0.0
    %815 = vmatpush1.msra.mxu0 0.0
    %816 = vmatprep.subr.mxu0 0.0
    %817 = vmatpush1.msra.mxu0 0.0
    %818 = vmatprep.subr.mxu0 0.0
    %819 = vmatpush1.msra.mxu0 0.0
    %820 = vmatprep.subr.mxu0 0.0
    %821 = vmatpush1.msra.mxu0 0.0
    %822 = vmatprep.subr.mxu0 0.0
    %823 = vmatpush1.msra.mxu0 0.0
    %824 = vmatprep.subr.mxu0 0.0
    %825 = vmatpush1.msra.mxu0 0.0
    %826 = vmatprep.subr.mxu0 0.0
    %827 = vmatpush1.msra.mxu0 0.0
    %828 = vmatprep.subr.mxu0 0.0
    %829 = vmatpush1.msra.mxu0 0.0
    %830 = vmatprep.subr.mxu0 0.0
    %831 = vmatpush1.msra.mxu0 0.0
    %832 = vmatprep.subr.mxu0 0.0
    %833 = vmatpush1.msra.mxu0 0.0
    %834 = vmatprep.subr.mxu0 0.0
    %835 = vmatpush1.msra.mxu0 0.0
    %836 = vmatprep.subr.mxu0 0.0
    %837 = vmatpush1.msra.mxu0 0.0
    %838 = vmatprep.subr.mxu0 0.0
    %839 = vmatpush1.msra.mxu0 0.0
    %840 = vmatprep.subr.mxu0 0.0
    %841 = vmatpush1.msra.mxu0 0.0
    %842 = vmatprep.subr.mxu0 0.0
    %843 = vmatpush1.msra.mxu0 0.0
    %844 = vmatprep.subr.mxu0 0.0
    %845 = vmatpush1.msra.mxu0 0.0
    %846 = vmatprep.subr.mxu0 0.0
    %847 = vmatpush1.msra.mxu0 0.0
    %848 = vmatprep.subr.mxu0 0.0
    %849 = vmatpush1.msra.mxu0 0.0
    %850 = vmatprep.subr.mxu0 0.0
    %851 = vmatpush1.msra.mxu0 0.0
    %852 = vmatprep.mubr.f32.mxu0 0.0
    %853 = vmatmul.mubr.f32.gmra.mrb[0].mxu0 %v786
    %v854 = vpop.f32.mrb[0].mxu0
    %v855 = vadd.f32 0.0, %v854
    %v856 = vpop.f32.mrb[0].mxu0
    %857 = vdwg.mxu0
    %v859 = vsel %vm200, %v779, 0
    %v862 = vsel %vm200, %v855, 0
    %864 = vmatprep.subr.mxu0 0.0
    %865 = vmatpush1.msra.mxu0 %v192
    %866 = vmatprep.subr.mxu0 0.0
    %867 = vmatpush1.msra.mxu0 0.0
    %868 = vmatprep.subr.mxu0 0.0
    %869 = vmatpush1.msra.mxu0 0.0
    %870 = vmatprep.subr.mxu0 0.0
    %871 = vmatpush1.msra.mxu0 0.0
    %872 = vmatprep.subr.mxu0 0.0
    %873 = vmatpush1.msra.mxu0 0.0
    %874 = vmatprep.subr.mxu0 0.0
    %875 = vmatpush1.msra.mxu0 0.0
    %876 = vmatprep.subr.mxu0 0.0
    %877 = vmatpush1.msra.mxu0 0.0
    %878 = vmatprep.subr.mxu0 0.0
    %879 = vmatpush1.msra.mxu0 0.0
    %880 = vmatprep.subr.mxu0 0.0
    %881 = vmatpush1.msra.mxu0 0.0
    %882 = vmatprep.subr.mxu0 0.0
    %883 = vmatpush1.msra.mxu0 0.0
    %884 = vmatprep.subr.mxu0 0.0
    %885 = vmatpush1.msra.mxu0 0.0
    %886 = vmatprep.subr.mxu0 0.0
    %887 = vmatpush1.msra.mxu0 0.0
    %888 = vmatprep.subr.mxu0 0.0
    %889 = vmatpush1.msra.mxu0 0.0
    %890 = vmatprep.subr.mxu0 0.0
    %891 = vmatpush1.msra.mxu0 0.0
    %892 = vmatprep.subr.mxu0 0.0
    %893 = vmatpush1.msra.mxu0 0.0
    %894 = vmatprep.subr.mxu0 0.0
    %895 = vmatpush1.msra.mxu0 0.0
    %896 = vmatprep.subr.mxu0 0.0
    %897 = vmatpush1.msra.mxu0 0.0
    %898 = vmatprep.subr.mxu0 0.0
    %899 = vmatpush1.msra.mxu0 0.0
    %900 = vmatprep.subr.mxu0 0.0
    %901 = vmatpush1.msra.mxu0 0.0
    %902 = vmatprep.subr.mxu0 0.0
    %903 = vmatpush1.msra.mxu0 0.0
    %904 = vmatprep.subr.mxu0 0.0
    %905 = vmatpush1.msra.mxu0 0.0
    %906 = vmatprep.subr.mxu0 0.0
    %907 = vmatpush1.msra.mxu0 0.0
    %908 = vmatprep.subr.mxu0 0.0
    %909 = vmatpush1.msra.mxu0 0.0
    %910 = vmatprep.subr.mxu0 0.0
    %911 = vmatpush1.msra.mxu0 0.0
    %912 = vmatprep.subr.mxu0 0.0
    %913 = vmatpush1.msra.mxu0 0.0
    %914 = vmatprep.subr.mxu0 0.0
    %915 = vmatpush1.msra.mxu0 0.0
    %916 = vmatprep.subr.mxu0 0.0
    %917 = vmatpush1.msra.mxu0 0.0
    %918 = vmatprep.subr.mxu0 0.0
    %919 = vmatpush1.msra.mxu0 0.0
    %920 = vmatprep.subr.mxu0 0.0
    %921 = vmatpush1.msra.mxu0 0.0
    %922 = vmatprep.subr.mxu0 0.0
    %923 = vmatpush1.msra.mxu0 0.0
    %924 = vmatprep.subr.mxu0 0.0
    %925 = vmatpush1.msra.mxu0 0.0
    %926 = vmatprep.subr.mxu0 0.0
    %927 = vmatpush1.msra.mxu0 0.0
    %928 = vmatprep.mubr.f32.mxu0 0.0
    %929 = vmatmul.mubr.f32.gmra.mrb[0].mxu0 %v859
    %v930 = vpop.f32.mrb[0].mxu0
    %v931 = vadd.f32 0.0, %v930
    %v932 = vpop.f32.mrb[0].mxu0
    %933 = vmatprep.mubr.f32.mxu0 0.0
    %934 = vmatmul.mubr.f32.gmra.mrb[0].mxu0 %v862
    %v935 = vpop.f32.mrb[0].mxu0
    %v936 = vadd.f32 0.0, %v935
    %v937 = vpop.f32.mrb[0].mxu0
    %938 = vdwg.mxu0
    %v940 = vsel %vm200, %v449, 0
    %v943 = vsel %vm200, %v525, 0
    %945 = vmatprep.subr.mxu0 0.0
    %946 = vmatpush1.msra.mxu0 %v191
    %947 = vmatprep.subr.mxu0 0.0
    %948 = vmatpush1.msra.mxu0 0.0
    %949 = vmatprep.subr.mxu0 0.0
    %950 = vmatpush1.msra.mxu0 0.0
    %951 = vmatprep.subr.mxu0 0.0
    %952 = vmatpush1.msra.mxu0 0.0
    %953 = vmatprep.subr.mxu0 0.0
    %954 = vmatpush1.msra.mxu0 0.0
    %955 = vmatprep.subr.mxu0 0.0
    %956 = vmatpush1.msra.mxu0 0.0
    %957 = vmatprep.subr.mxu0 0.0
    %958 = vmatpush1.msra.mxu0 0.0
    %959 = vmatprep.subr.mxu0 0.0
    %960 = vmatpush1.msra.mxu0 0.0
    %961 = vmatprep.subr.mxu0 0.0
    %962 = vmatpush1.msra.mxu0 0.0
    %963 = vmatprep.subr.mxu0 0.0
    %964 = vmatpush1.msra.mxu0 0.0
    %965 = vmatprep.subr.mxu0 0.0
    %966 = vmatpush1.msra.mxu0 0.0
    %967 = vmatprep.subr.mxu0 0.0
    %968 = vmatpush1.msra.mxu0 0.0
    %969 = vmatprep.subr.mxu0 0.0
    %970 = vmatpush1.msra.mxu0 0.0
    %971 = vmatprep.subr.mxu0 0.0
    %972 = vmatpush1.msra.mxu0 0.0
    %973 = vmatprep.subr.mxu0 0.0
    %974 = vmatpush1.msra.mxu0 0.0
    %975 = vmatprep.subr.mxu0 0.0
    %976 = vmatpush1.msra.mxu0 0.0
    %977 = vmatprep.subr.mxu0 0.0
    %978 = vmatpush1.msra.mxu0 0.0
    %979 = vmatprep.subr.mxu0 0.0
    %980 = vmatpush1.msra.mxu0 0.0
    %981 = vmatprep.subr.mxu0 0.0
    %982 = vmatpush1.msra.mxu0 0.0
    %983 = vmatprep.subr.mxu0 0.0
    %984 = vmatpush1.msra.mxu0 0.0
    %985 = vmatprep.subr.mxu0 0.0
    %986 = vmatpush1.msra.mxu0 0.0
    %987 = vmatprep.subr.mxu0 0.0
    %988 = vmatpush1.msra.mxu0 0.0
    %989 = vmatprep.subr.mxu0 0.0
    %990 = vmatpush1.msra.mxu0 0.0
    %991 = vmatprep.subr.mxu0 0.0
    %992 = vmatpush1.msra.mxu0 0.0
    %993 = vmatprep.subr.mxu0 0.0
    %994 = vmatpush1.msra.mxu0 0.0
    %995 = vmatprep.subr.mxu0 0.0
    %996 = vmatpush1.msra.mxu0 0.0
    %997 = vmatprep.subr.mxu0 0.0
    %998 = vmatpush1.msra.mxu0 0.0
    %999 = vmatprep.subr.mxu0 0.0
    %1000 = vmatpush1.msra.mxu0 0.0
    %1001 = vmatprep.subr.mxu0 0.0
    %1002 = vmatpush1.msra.mxu0 0.0
    %1003 = vmatprep.subr.mxu0 0.0
    %1004 = vmatpush1.msra.mxu0 0.0
    %1005 = vmatprep.subr.mxu0 0.0
    %1006 = vmatpush1.msra.mxu0 0.0
    %1007 = vmatprep.subr.mxu0 0.0
    %1008 = vmatpush1.msra.mxu0 0.0
    %1009 = vmatprep.mubr.f32.mxu0 0.0
    %1010 = vmatmul.mubr.f32.gmra.mrb[0].mxu0 %v940
    %v1011 = vpop.f32.mrb[0].mxu0
    %v1012 = vadd.f32 %v931, %v1011
    %v1013 = vpop.f32.mrb[0].mxu0
    %1014 = vmatprep.mubr.f32.mxu0 0.0
    %1015 = vmatmul.mubr.f32.gmra.mrb[0].mxu0 %v943
    %v1016 = vpop.f32.mrb[0].mxu0
    %v1017 = vadd.f32 %v936, %v1016
    %v1018 = vpop.f32.mrb[0].mxu0
    %1019 = vdwg.mxu0
    %1020 = vrot.lane.b32.xlu0 %v195, 112
    %v1021 = vpop.permute.xlu0 %1020
    %1022 = vrot.lane.b32.xlu0 %v177, 80
    %v1023 = vpop.permute.xlu0 %1022
    %v1024 = vsel %vm200, %v1021, 0
    %v1026 = vsel %vm200, %v1023, 0
    %1028 = vmatprep.subr.mxu0 0.0
    %1029 = vmatpush1.xpose.msra.mxu0 %v1026
    %1030 = vmatprep.subr.mxu0 0.0
    %1031 = vmatpush1.xpose.msra.mxu0 0.0
    %1032 = vmatprep.subr.mxu0 0.0
    %1033 = vmatpush1.xpose.msra.mxu0 0.0
    %1034 = vmatprep.subr.mxu0 0.0
    %1035 = vmatpush1.xpose.msra.mxu0 0.0
    %1036 = vmatprep.subr.mxu0 0.0
    %1037 = vmatpush1.xpose.msra.mxu0 0.0
    %1038 = vmatprep.subr.mxu0 0.0
    %1039 = vmatpush1.xpose.msra.mxu0 0.0
    %1040 = vmatprep.subr.mxu0 0.0
    %1041 = vmatpush1.xpose.msra.mxu0 0.0
    %1042 = vmatprep.subr.mxu0 0.0
    %1043 = vmatpush1.xpose.msra.mxu0 0.0
    %1044 = vmatprep.subr.mxu0 0.0
    %1045 = vmatpush1.xpose.msra.mxu0 0.0
    %1046 = vmatprep.subr.mxu0 0.0
    %1047 = vmatpush1.xpose.msra.mxu0 0.0
    %1048 = vmatprep.subr.mxu0 0.0
    %1049 = vmatpush1.xpose.msra.mxu0 0.0
    %1050 = vmatprep.subr.mxu0 0.0
    %1051 = vmatpush1.xpose.msra.mxu0 0.0
    %1052 = vmatprep.subr.mxu0 0.0
    %1053 = vmatpush1.xpose.msra.mxu0 0.0
    %1054 = vmatprep.subr.mxu0 0.0
    %1055 = vmatpush1.xpose.msra.mxu0 0.0
    %1056 = vmatprep.subr.mxu0 0.0
    %1057 = vmatpush1.xpose.msra.mxu0 0.0
    %1058 = vmatprep.subr.mxu0 0.0
    %1059 = vmatpush1.xpose.msra.mxu0 0.0
    %1060 = vmatprep.subr.mxu0 0.0
    %1061 = vmatpush1.xpose.msra.mxu0 0.0
    %1062 = vmatprep.subr.mxu0 0.0
    %1063 = vmatpush1.xpose.msra.mxu0 0.0
    %1064 = vmatprep.subr.mxu0 0.0
    %1065 = vmatpush1.xpose.msra.mxu0 0.0
    %1066 = vmatprep.subr.mxu0 0.0
    %1067 = vmatpush1.xpose.msra.mxu0 0.0
    %1068 = vmatprep.subr.mxu0 0.0
    %1069 = vmatpush1.xpose.msra.mxu0 0.0
    %1070 = vmatprep.subr.mxu0 0.0
    %1071 = vmatpush1.xpose.msra.mxu0 0.0
    %1072 = vmatprep.subr.mxu0 0.0
    %1073 = vmatpush1.xpose.msra.mxu0 0.0
    %1074 = vmatprep.subr.mxu0 0.0
    %1075 = vmatpush1.xpose.msra.mxu0 0.0
    %1076 = vmatprep.subr.mxu0 0.0
    %1077 = vmatpush1.xpose.msra.mxu0 0.0
    %1078 = vmatprep.subr.mxu0 0.0
    %1079 = vmatpush1.xpose.msra.mxu0 0.0
    %1080 = vmatprep.subr.mxu0 0.0
    %1081 = vmatpush1.xpose.msra.mxu0 0.0
    %1082 = vmatprep.subr.mxu0 0.0
    %1083 = vmatpush1.xpose.msra.mxu0 0.0
    %1084 = vmatprep.subr.mxu0 0.0
    %1085 = vmatpush1.xpose.msra.mxu0 0.0
    %1086 = vmatprep.subr.mxu0 0.0
    %1087 = vmatpush1.xpose.msra.mxu0 0.0
    %1088 = vmatprep.subr.mxu0 0.0
    %1089 = vmatpush1.xpose.msra.mxu0 0.0
    %1090 = vmatprep.subr.mxu0 0.0
    %1091 = vmatpush1.xpose.msra.mxu0 0.0
    %1092 = vmatprep.mubr.f32.mxu0 0.0
    %1093 = vmatmul.mubr.f32.gmra.mrb[0].mxu0 %v1024
    %v1094 = vpop.f32.mrb[0].mxu0
    %v1095 = vadd.f32 %v190, %v1094
    %v1096 = vpop.f32.mrb[0].mxu0
    %1097 = vdwg.mxu0
    %1098 = vrot.lane.b32.xlu0 %v196, 112
    %v1099 = vpop.permute.xlu0 %1098
    %1100 = vrot.lane.b32.xlu0 %v182, 80
    %v1101 = vpop.permute.xlu0 %1100
    %v1102 = vsel %vm200, %v1099, 0
    %v1104 = vsel %vm200, %v1101, 0
    %1106 = vmatprep.subr.mxu0 0.0
    %1107 = vmatpush1.xpose.msra.mxu0 %v1104
    %1108 = vmatprep.subr.mxu0 0.0
    %1109 = vmatpush1.xpose.msra.mxu0 0.0
    %1110 = vmatprep.subr.mxu0 0.0
    %1111 = vmatpush1.xpose.msra.mxu0 0.0
    %1112 = vmatprep.subr.mxu0 0.0
    %1113 = vmatpush1.xpose.msra.mxu0 0.0
    %1114 = vmatprep.subr.mxu0 0.0
    %1115 = vmatpush1.xpose.msra.mxu0 0.0
    %1116 = vmatprep.subr.mxu0 0.0
    %1117 = vmatpush1.xpose.msra.mxu0 0.0
    %1118 = vmatprep.subr.mxu0 0.0
    %1119 = vmatpush1.xpose.msra.mxu0 0.0
    %1120 = vmatprep.subr.mxu0 0.0
    %1121 = vmatpush1.xpose.msra.mxu0 0.0
    %1122 = vmatprep.subr.mxu0 0.0
    %1123 = vmatpush1.xpose.msra.mxu0 0.0
    %1124 = vmatprep.subr.mxu0 0.0
    %1125 = vmatpush1.xpose.msra.mxu0 0.0
    %1126 = vmatprep.subr.mxu0 0.0
    %1127 = vmatpush1.xpose.msra.mxu0 0.0
    %1128 = vmatprep.subr.mxu0 0.0
    %1129 = vmatpush1.xpose.msra.mxu0 0.0
    %1130 = vmatprep.subr.mxu0 0.0
    %1131 = vmatpush1.xpose.msra.mxu0 0.0
    %1132 = vmatprep.subr.mxu0 0.0
    %1133 = vmatpush1.xpose.msra.mxu0 0.0
    %1134 = vmatprep.subr.mxu0 0.0
    %1135 = vmatpush1.xpose.msra.mxu0 0.0
    %1136 = vmatprep.subr.mxu0 0.0
    %1137 = vmatpush1.xpose.msra.mxu0 0.0
    %1138 = vmatprep.subr.mxu0 0.0
    %1139 = vmatpush1.xpose.msra.mxu0 0.0
    %1140 = vmatprep.subr.mxu0 0.0
    %1141 = vmatpush1.xpose.msra.mxu0 0.0
    %1142 = vmatprep.subr.mxu0 0.0
    %1143 = vmatpush1.xpose.msra.mxu0 0.0
    %1144 = vmatprep.subr.mxu0 0.0
    %1145 = vmatpush1.xpose.msra.mxu0 0.0
    %1146 = vmatprep.subr.mxu0 0.0
    %1147 = vmatpush1.xpose.msra.mxu0 0.0
    %1148 = vmatprep.subr.mxu0 0.0
    %1149 = vmatpush1.xpose.msra.mxu0 0.0
    %1150 = vmatprep.subr.mxu0 0.0
    %1151 = vmatpush1.xpose.msra.mxu0 0.0
    %1152 = vmatprep.subr.mxu0 0.0
    %1153 = vmatpush1.xpose.msra.mxu0 0.0
    %1154 = vmatprep.subr.mxu0 0.0
    %1155 = vmatpush1.xpose.msra.mxu0 0.0
    %1156 = vmatprep.subr.mxu0 0.0
    %1157 = vmatpush1.xpose.msra.mxu0 0.0
    %1158 = vmatprep.subr.mxu0 0.0
    %1159 = vmatpush1.xpose.msra.mxu0 0.0
    %1160 = vmatprep.subr.mxu0 0.0
    %1161 = vmatpush1.xpose.msra.mxu0 0.0
    %1162 = vmatprep.subr.mxu0 0.0
    %1163 = vmatpush1.xpose.msra.mxu0 0.0
    %1164 = vmatprep.subr.mxu0 0.0
    %1165 = vmatpush1.xpose.msra.mxu0 0.0
    %1166 = vmatprep.subr.mxu0 0.0
    %1167 = vmatpush1.xpose.msra.mxu0 0.0
    %1168 = vmatprep.subr.mxu0 0.0
    %1169 = vmatpush1.xpose.msra.mxu0 0.0
    %1170 = vmatprep.mubr.f32.mxu0 0.0
    %1171 = vmatmul.mubr.f32.gmra.mrb[0].mxu0 %v1102
    %v1172 = vpop.f32.mrb[0].mxu0
    %v1173 = vadd.f32 %v190, %v1172
    %v1174 = vpop.f32.mrb[0].mxu0
    %1175 = vdwg.mxu0
    %v1176 = vsel %vm200, %v1095, -inf
    %1177 = vmax.xlane.f32.xlu0 %v1176
    %v1178 = vpop.xlane.xlu0 %1177
    %v1179 = vsel %vm200, %v1173, -inf
    %1180 = vmax.xlane.f32.xlu0 %v1179
    %v1181 = vpop.xlane.xlu0 %1180
    %v1182 = vsub.f32 %v1095, %v1178
    %v1183 = vsub.f32 %v1173, %v1181
    %v1184 = vmul.f32 %v1182, 1.442695
    %v1185 = vpow.pop %v1184
    %v1186 = vmul.f32 %v1183, 1.442695
    %v1187 = vpow.pop %v1186
    %v1188 = vsel %vm200, %v1185, 0.0
    %1189 = vadd.xlane.f32.xlu0 %v1188
    %v1190 = vpop.xlane.xlu0 %1189
    %v1191 = vsel %vm200, %v1187, 0.0
    %1192 = vadd.xlane.f32.xlu0 %v1191
    %v1193 = vpop.xlane.xlu0 %1192
    %v1194 = vrcp.pop %v1190
    %v1195 = vrcp.pop %v1193
    %v1196 = vmul.f32 %v1185, %v1194
    %v1197 = vmul.f32 %v1187, %v1195
    %1198 = vrot.lane.b32.xlu0 %v177, 48
    %v1199 = vpop.permute.xlu0 %1198
    %v1202 = vsel %vm200, %v1196, 0
    %1204 = vmatprep.subr.mxu0 0.0
    %1205 = vmatpush1.msra.mxu0 %v1199
    %1206 = vmatprep.subr.mxu0 0.0
    %1207 = vmatpush1.msra.mxu0 0.0
    %1208 = vmatprep.subr.mxu0 0.0
    %1209 = vmatpush1.msra.mxu0 0.0
    %1210 = vmatprep.subr.mxu0 0.0
    %1211 = vmatpush1.msra.mxu0 0.0
    %1212 = vmatprep.subr.mxu0 0.0
    %1213 = vmatpush1.msra.mxu0 0.0
    %1214 = vmatprep.subr.mxu0 0.0
    %1215 = vmatpush1.msra.mxu0 0.0
    %1216 = vmatprep.subr.mxu0 0.0
    %1217 = vmatpush1.msra.mxu0 0.0
    %1218 = vmatprep.subr.mxu0 0.0
    %1219 = vmatpush1.msra.mxu0 0.0
    %1220 = vmatprep.subr.mxu0 0.0
    %1221 = vmatpush1.msra.mxu0 0.0
    %1222 = vmatprep.subr.mxu0 0.0
    %1223 = vmatpush1.msra.mxu0 0.0
    %1224 = vmatprep.subr.mxu0 0.0
    %1225 = vmatpush1.msra.mxu0 0.0
    %1226 = vmatprep.subr.mxu0 0.0
    %1227 = vmatpush1.msra.mxu0 0.0
    %1228 = vmatprep.subr.mxu0 0.0
    %1229 = vmatpush1.msra.mxu0 0.0
    %1230 = vmatprep.subr.mxu0 0.0
    %1231 = vmatpush1.msra.mxu0 0.0
    %1232 = vmatprep.subr.mxu0 0.0
    %1233 = vmatpush1.msra.mxu0 0.0
    %1234 = vmatprep.subr.mxu0 0.0
    %1235 = vmatpush1.msra.mxu0 0.0
    %1236 = vmatprep.subr.mxu0 0.0
    %1237 = vmatpush1.msra.mxu0 0.0
    %1238 = vmatprep.subr.mxu0 0.0
    %1239 = vmatpush1.msra.mxu0 0.0
    %1240 = vmatprep.subr.mxu0 0.0
    %1241 = vmatpush1.msra.mxu0 0.0
    %1242 = vmatprep.subr.mxu0 0.0
    %1243 = vmatpush1.msra.mxu0 0.0
    %1244 = vmatprep.subr.mxu0 0.0
    %1245 = vmatpush1.msra.mxu0 0.0
    %1246 = vmatprep.subr.mxu0 0.0
    %1247 = vmatpush1.msra.mxu0 0.0
    %1248 = vmatprep.subr.mxu0 0.0
    %1249 = vmatpush1.msra.mxu0 0.0
    %1250 = vmatprep.subr.mxu0 0.0
    %1251 = vmatpush1.msra.mxu0 0.0
    %1252 = vmatprep.subr.mxu0 0.0
    %1253 = vmatpush1.msra.mxu0 0.0
    %1254 = vmatprep.subr.mxu0 0.0
    %1255 = vmatpush1.msra.mxu0 0.0
    %1256 = vmatprep.subr.mxu0 0.0
    %1257 = vmatpush1.msra.mxu0 0.0
    %1258 = vmatprep.subr.mxu0 0.0
    %1259 = vmatpush1.msra.mxu0 0.0
    %1260 = vmatprep.subr.mxu0 0.0
    %1261 = vmatpush1.msra.mxu0 0.0
    %1262 = vmatprep.subr.mxu0 0.0
    %1263 = vmatpush1.msra.mxu0 0.0
    %1264 = vmatprep.subr.mxu0 0.0
    %1265 = vmatpush1.msra.mxu0 0.0
    %1266 = vmatprep.subr.mxu0 0.0
    %1267 = vmatpush1.msra.mxu0 0.0
    %1268 = vmatprep.mubr.f32.mxu0 0.0
    %1269 = vmatmul.mubr.f32.gmra.mrb[0].mxu0 %v1202
    %v1270 = vpop.f32.mrb[0].mxu0
    %v1271 = vadd.f32 0.0, %v1270
    %v1272 = vpop.f32.mrb[0].mxu0
    %1273 = vdwg.mxu0
    %1274 = vrot.lane.b32.xlu0 %v182, 48
    %v1275 = vpop.permute.xlu0 %1274
    %v1278 = vsel %vm200, %v1197, 0
    %1280 = vmatprep.subr.mxu0 0.0
    %1281 = vmatpush1.msra.mxu0 %v1275
    %1282 = vmatprep.subr.mxu0 0.0
    %1283 = vmatpush1.msra.mxu0 0.0
    %1284 = vmatprep.subr.mxu0 0.0
    %1285 = vmatpush1.msra.mxu0 0.0
    %1286 = vmatprep.subr.mxu0 0.0
    %1287 = vmatpush1.msra.mxu0 0.0
    %1288 = vmatprep.subr.mxu0 0.0
    %1289 = vmatpush1.msra.mxu0 0.0
    %1290 = vmatprep.subr.mxu0 0.0
    %1291 = vmatpush1.msra.mxu0 0.0
    %1292 = vmatprep.subr.mxu0 0.0
    %1293 = vmatpush1.msra.mxu0 0.0
    %1294 = vmatprep.subr.mxu0 0.0
    %1295 = vmatpush1.msra.mxu0 0.0
    %1296 = vmatprep.subr.mxu0 0.0
    %1297 = vmatpush1.msra.mxu0 0.0
    %1298 = vmatprep.subr.mxu0 0.0
    %1299 = vmatpush1.msra.mxu0 0.0
    %1300 = vmatprep.subr.mxu0 0.0
    %1301 = vmatpush1.msra.mxu0 0.0
    %1302 = vmatprep.subr.mxu0 0.0
    %1303 = vmatpush1.msra.mxu0 0.0
    %1304 = vmatprep.subr.mxu0 0.0
    %1305 = vmatpush1.msra.mxu0 0.0
    %1306 = vmatprep.subr.mxu0 0.0
    %1307 = vmatpush1.msra.mxu0 0.0
    %1308 = vmatprep.subr.mxu0 0.0
    %1309 = vmatpush1.msra.mxu0 0.0
    %1310 = vmatprep.subr.mxu0 0.0
    %1311 = vmatpush1.msra.mxu0 0.0
    %1312 = vmatprep.subr.mxu0 0.0
    %1313 = vmatpush1.msra.mxu0 0.0
    %1314 = vmatprep.subr.mxu0 0.0
    %1315 = vmatpush1.msra.mxu0 0.0
    %1316 = vmatprep.subr.mxu0 0.0
    %1317 = vmatpush1.msra.mxu0 0.0
    %1318 = vmatprep.subr.mxu0 0.0
    %1319 = vmatpush1.msra.mxu0 0.0
    %1320 = vmatprep.subr.mxu0 0.0
    %1321 = vmatpush1.msra.mxu0 0.0
    %1322 = vmatprep.subr.mxu0 0.0
    %1323 = vmatpush1.msra.mxu0 0.0
    %1324 = vmatprep.subr.mxu0 0.0
    %1325 = vmatpush1.msra.mxu0 0.0
    %1326 = vmatprep.subr.mxu0 0.0
    %1327 = vmatpush1.msra.mxu0 0.0
    %1328 = vmatprep.subr.mxu0 0.0
    %1329 = vmatpush1.msra.mxu0 0.0
    %1330 = vmatprep.subr.mxu0 0.0
    %1331 = vmatpush1.msra.mxu0 0.0
    %1332 = vmatprep.subr.mxu0 0.0
    %1333 = vmatpush1.msra.mxu0 0.0
    %1334 = vmatprep.subr.mxu0 0.0
    %1335 = vmatpush1.msra.mxu0 0.0
    %1336 = vmatprep.subr.mxu0 0.0
    %1337 = vmatpush1.msra.mxu0 0.0
    %1338 = vmatprep.subr.mxu0 0.0
    %1339 = vmatpush1.msra.mxu0 0.0
    %1340 = vmatprep.subr.mxu0 0.0
    %1341 = vmatpush1.msra.mxu0 0.0
    %1342 = vmatprep.subr.mxu0 0.0
    %1343 = vmatpush1.msra.mxu0 0.0
    %1344 = vmatprep.mubr.f32.mxu0 0.0
    %1345 = vmatmul.mubr.f32.gmra.mrb[0].mxu0 %v1278
    %v1346 = vpop.f32.mrb[0].mxu0
    %v1347 = vadd.f32 0.0, %v1346
    %v1348 = vpop.f32.mrb[0].mxu0
    %1349 = vdwg.mxu0
    %v1351 = vsel %vm200, %v1271, 0
    %v1354 = vsel %vm200, %v1347, 0
    %1356 = vmatprep.subr.mxu0 0.0
    %1357 = vmatpush1.msra.mxu0 %v193
    %1358 = vmatprep.subr.mxu0 0.0
    %1359 = vmatpush1.msra.mxu0 0.0
    %1360 = vmatprep.subr.mxu0 0.0
    %1361 = vmatpush1.msra.mxu0 0.0
    %1362 = vmatprep.subr.mxu0 0.0
    %1363 = vmatpush1.msra.mxu0 0.0
    %1364 = vmatprep.subr.mxu0 0.0
    %1365 = vmatpush1.msra.mxu0 0.0
    %1366 = vmatprep.subr.mxu0 0.0
    %1367 = vmatpush1.msra.mxu0 0.0
    %1368 = vmatprep.subr.mxu0 0.0
    %1369 = vmatpush1.msra.mxu0 0.0
    %1370 = vmatprep.subr.mxu0 0.0
    %1371 = vmatpush1.msra.mxu0 0.0
    %1372 = vmatprep.subr.mxu0 0.0
    %1373 = vmatpush1.msra.mxu0 0.0
    %1374 = vmatprep.subr.mxu0 0.0
    %1375 = vmatpush1.msra.mxu0 0.0
    %1376 = vmatprep.subr.mxu0 0.0
    %1377 = vmatpush1.msra.mxu0 0.0
    %1378 = vmatprep.subr.mxu0 0.0
    %1379 = vmatpush1.msra.mxu0 0.0
    %1380 = vmatprep.subr.mxu0 0.0
    %1381 = vmatpush1.msra.mxu0 0.0
    %1382 = vmatprep.subr.mxu0 0.0
    %1383 = vmatpush1.msra.mxu0 0.0
    %1384 = vmatprep.subr.mxu0 0.0
    %1385 = vmatpush1.msra.mxu0 0.0
    %1386 = vmatprep.subr.mxu0 0.0
    %1387 = vmatpush1.msra.mxu0 0.0
    %1388 = vmatprep.subr.mxu0 0.0
    %1389 = vmatpush1.msra.mxu0 0.0
    %1390 = vmatprep.subr.mxu0 0.0
    %1391 = vmatpush1.msra.mxu0 0.0
    %1392 = vmatprep.subr.mxu0 0.0
    %1393 = vmatpush1.msra.mxu0 0.0
    %1394 = vmatprep.subr.mxu0 0.0
    %1395 = vmatpush1.msra.mxu0 0.0
    %1396 = vmatprep.subr.mxu0 0.0
    %1397 = vmatpush1.msra.mxu0 0.0
    %1398 = vmatprep.subr.mxu0 0.0
    %1399 = vmatpush1.msra.mxu0 0.0
    %1400 = vmatprep.subr.mxu0 0.0
    %1401 = vmatpush1.msra.mxu0 0.0
    %1402 = vmatprep.subr.mxu0 0.0
    %1403 = vmatpush1.msra.mxu0 0.0
    %1404 = vmatprep.subr.mxu0 0.0
    %1405 = vmatpush1.msra.mxu0 0.0
    %1406 = vmatprep.subr.mxu0 0.0
    %1407 = vmatpush1.msra.mxu0 0.0
    %1408 = vmatprep.subr.mxu0 0.0
    %1409 = vmatpush1.msra.mxu0 0.0
    %1410 = vmatprep.subr.mxu0 0.0
    %1411 = vmatpush1.msra.mxu0 0.0
    %1412 = vmatprep.subr.mxu0 0.0
    %1413 = vmatpush1.msra.mxu0 0.0
    %1414 = vmatprep.subr.mxu0 0.0
    %1415 = vmatpush1.msra.mxu0 0.0
    %1416 = vmatprep.subr.mxu0 0.0
    %1417 = vmatpush1.msra.mxu0 0.0
    %1418 = vmatprep.subr.mxu0 0.0
    %1419 = vmatpush1.msra.mxu0 0.0
    %1420 = vmatprep.mubr.f32.mxu0 0.0
    %1421 = vmatmul.mubr.f32.gmra.mrb[0].mxu0 %v1351
    %v1422 = vpop.f32.mrb[0].mxu0
    %v1423 = vadd.f32 0.0, %v1422
    %v1424 = vpop.f32.mrb[0].mxu0
    %1425 = vmatprep.mubr.f32.mxu0 0.0
    %1426 = vmatmul.mubr.f32.gmra.mrb[0].mxu0 %v1354
    %v1427 = vpop.f32.mrb[0].mxu0
    %v1428 = vadd.f32 0.0, %v1427
    %v1429 = vpop.f32.mrb[0].mxu0
    %1430 = vdwg.mxu0
    %v1431 = vadd.f32 %v1012, %v1423
    %v1432 = vadd.f32 %v1017, %v1428
    %1433 = vrot.lane.b32.xlu0 %v195, 104
    %v1434 = vpop.permute.xlu0 %1433
    %1435 = vrot.lane.b32.xlu0 %v177, 72
    %v1436 = vpop.permute.xlu0 %1435
    %v1437 = vsel %vm200, %v1434, 0
    %v1439 = vsel %vm200, %v1436, 0
    %1441 = vmatprep.subr.mxu0 0.0
    %1442 = vmatpush1.xpose.msra.mxu0 %v1439
    %1443 = vmatprep.subr.mxu0 0.0
    %1444 = vmatpush1.xpose.msra.mxu0 0.0
    %1445 = vmatprep.subr.mxu0 0.0
    %1446 = vmatpush1.xpose.msra.mxu0 0.0
    %1447 = vmatprep.subr.mxu0 0.0
    %1448 = vmatpush1.xpose.msra.mxu0 0.0
    %1449 = vmatprep.subr.mxu0 0.0
    %1450 = vmatpush1.xpose.msra.mxu0 0.0
    %1451 = vmatprep.subr.mxu0 0.0
    %1452 = vmatpush1.xpose.msra.mxu0 0.0
    %1453 = vmatprep.subr.mxu0 0.0
    %1454 = vmatpush1.xpose.msra.mxu0 0.0
    %1455 = vmatprep.subr.mxu0 0.0
    %1456 = vmatpush1.xpose.msra.mxu0 0.0
    %1457 = vmatprep.subr.mxu0 0.0
    %1458 = vmatpush1.xpose.msra.mxu0 0.0
    %1459 = vmatprep.subr.mxu0 0.0
    %1460 = vmatpush1.xpose.msra.mxu0 0.0
    %1461 = vmatprep.subr.mxu0 0.0
    %1462 = vmatpush1.xpose.msra.mxu0 0.0
    %1463 = vmatprep.subr.mxu0 0.0
    %1464 = vmatpush1.xpose.msra.mxu0 0.0
    %1465 = vmatprep.subr.mxu0 0.0
    %1466 = vmatpush1.xpose.msra.mxu0 0.0
    %1467 = vmatprep.subr.mxu0 0.0
    %1468 = vmatpush1.xpose.msra.mxu0 0.0
    %1469 = vmatprep.subr.mxu0 0.0
    %1470 = vmatpush1.xpose.msra.mxu0 0.0
    %1471 = vmatprep.subr.mxu0 0.0
    %1472 = vmatpush1.xpose.msra.mxu0 0.0
    %1473 = vmatprep.subr.mxu0 0.0
    %1474 = vmatpush1.xpose.msra.mxu0 0.0
    %1475 = vmatprep.subr.mxu0 0.0
    %1476 = vmatpush1.xpose.msra.mxu0 0.0
    %1477 = vmatprep.subr.mxu0 0.0
    %1478 = vmatpush1.xpose.msra.mxu0 0.0
    %1479 = vmatprep.subr.mxu0 0.0
    %1480 = vmatpush1.xpose.msra.mxu0 0.0
    %1481 = vmatprep.subr.mxu0 0.0
    %1482 = vmatpush1.xpose.msra.mxu0 0.0
    %1483 = vmatprep.subr.mxu0 0.0
    %1484 = vmatpush1.xpose.msra.mxu0 0.0
    %1485 = vmatprep.subr.mxu0 0.0
    %1486 = vmatpush1.xpose.msra.mxu0 0.0
    %1487 = vmatprep.subr.mxu0 0.0
    %1488 = vmatpush1.xpose.msra.mxu0 0.0
    %1489 = vmatprep.subr.mxu0 0.0
    %1490 = vmatpush1.xpose.msra.mxu0 0.0
    %1491 = vmatprep.subr.mxu0 0.0
    %1492 = vmatpush1.xpose.msra.mxu0 0.0
    %1493 = vmatprep.subr.mxu0 0.0
    %1494 = vmatpush1.xpose.msra.mxu0 0.0
    %1495 = vmatprep.subr.mxu0 0.0
    %1496 = vmatpush1.xpose.msra.mxu0 0.0
    %1497 = vmatprep.subr.mxu0 0.0
    %1498 = vmatpush1.xpose.msra.mxu0 0.0
    %1499 = vmatprep.subr.mxu0 0.0
    %1500 = vmatpush1.xpose.msra.mxu0 0.0
    %1501 = vmatprep.subr.mxu0 0.0
    %1502 = vmatpush1.xpose.msra.mxu0 0.0
    %1503 = vmatprep.subr.mxu0 0.0
    %1504 = vmatpush1.xpose.msra.mxu0 0.0
    %1505 = vmatprep.mubr.f32.mxu0 0.0
    %1506 = vmatmul.mubr.f32.gmra.mrb[0].mxu0 %v1437
    %v1507 = vpop.f32.mrb[0].mxu0
    %v1508 = vadd.f32 %v190, %v1507
    %v1509 = vpop.f32.mrb[0].mxu0
    %1510 = vdwg.mxu0
    %1511 = vrot.lane.b32.xlu0 %v196, 104
    %v1512 = vpop.permute.xlu0 %1511
    %1513 = vrot.lane.b32.xlu0 %v182, 72
    %v1514 = vpop.permute.xlu0 %1513
    %v1515 = vsel %vm200, %v1512, 0
    %v1517 = vsel %vm200, %v1514, 0
    %1519 = vmatprep.subr.mxu0 0.0
    %1520 = vmatpush1.xpose.msra.mxu0 %v1517
    %1521 = vmatprep.subr.mxu0 0.0
    %1522 = vmatpush1.xpose.msra.mxu0 0.0
    %1523 = vmatprep.subr.mxu0 0.0
    %1524 = vmatpush1.xpose.msra.mxu0 0.0
    %1525 = vmatprep.subr.mxu0 0.0
    %1526 = vmatpush1.xpose.msra.mxu0 0.0
    %1527 = vmatprep.subr.mxu0 0.0
    %1528 = vmatpush1.xpose.msra.mxu0 0.0
    %1529 = vmatprep.subr.mxu0 0.0
    %1530 = vmatpush1.xpose.msra.mxu0 0.0
    %1531 = vmatprep.subr.mxu0 0.0
    %1532 = vmatpush1.xpose.msra.mxu0 0.0
    %1533 = vmatprep.subr.mxu0 0.0
    %1534 = vmatpush1.xpose.msra.mxu0 0.0
    %1535 = vmatprep.subr.mxu0 0.0
    %1536 = vmatpush1.xpose.msra.mxu0 0.0
    %1537 = vmatprep.subr.mxu0 0.0
    %1538 = vmatpush1.xpose.msra.mxu0 0.0
    %1539 = vmatprep.subr.mxu0 0.0
    %1540 = vmatpush1.xpose.msra.mxu0 0.0
    %1541 = vmatprep.subr.mxu0 0.0
    %1542 = vmatpush1.xpose.msra.mxu0 0.0
    %1543 = vmatprep.subr.mxu0 0.0
    %1544 = vmatpush1.xpose.msra.mxu0 0.0
    %1545 = vmatprep.subr.mxu0 0.0
    %1546 = vmatpush1.xpose.msra.mxu0 0.0
    %1547 = vmatprep.subr.mxu0 0.0
    %1548 = vmatpush1.xpose.msra.mxu0 0.0
    %1549 = vmatprep.subr.mxu0 0.0
    %1550 = vmatpush1.xpose.msra.mxu0 0.0
    %1551 = vmatprep.subr.mxu0 0.0
    %1552 = vmatpush1.xpose.msra.mxu0 0.0
    %1553 = vmatprep.subr.mxu0 0.0
    %1554 = vmatpush1.xpose.msra.mxu0 0.0
    %1555 = vmatprep.subr.mxu0 0.0
    %1556 = vmatpush1.xpose.msra.mxu0 0.0
    %1557 = vmatprep.subr.mxu0 0.0
    %1558 = vmatpush1.xpose.msra.mxu0 0.0
    %1559 = vmatprep.subr.mxu0 0.0
    %1560 = vmatpush1.xpose.msra.mxu0 0.0
    %1561 = vmatprep.subr.mxu0 0.0
    %1562 = vmatpush1.xpose.msra.mxu0 0.0
    %1563 = vmatprep.subr.mxu0 0.0
    %1564 = vmatpush1.xpose.msra.mxu0 0.0
    %1565 = vmatprep.subr.mxu0 0.0
    %1566 = vmatpush1.xpose.msra.mxu0 0.0
    %1567 = vmatprep.subr.mxu0 0.0
    %1568 = vmatpush1.xpose.msra.mxu0 0.0
    %1569 = vmatprep.subr.mxu0 0.0
    %1570 = vmatpush1.xpose.msra.mxu0 0.0
    %1571 = vmatprep.subr.mxu0 0.0
    %1572 = vmatpush1.xpose.msra.mxu0 0.0
    %1573 = vmatprep.subr.mxu0 0.0
    %1574 = vmatpush1.xpose.msra.mxu0 0.0
    %1575 = vmatprep.subr.mxu0 0.0
    %1576 = vmatpush1.xpose.msra.mxu0 0.0
    %1577 = vmatprep.subr.mxu0 0.0
    %1578 = vmatpush1.xpose.msra.mxu0 0.0
    %1579 = vmatprep.subr.mxu0 0.0
    %1580 = vmatpush1.xpose.msra.mxu0 0.0
    %1581 = vmatprep.subr.mxu0 0.0
    %1582 = vmatpush1.xpose.msra.mxu0 0.0
    %1583 = vmatprep.mubr.f32.mxu0 0.0
    %1584 = vmatmul.mubr.f32.gmra.mrb[0].mxu0 %v1515
    %v1585 = vpop.f32.mrb[0].mxu0
    %v1586 = vadd.f32 %v190, %v1585
    %v1587 = vpop.f32.mrb[0].mxu0
    %1588 = vdwg.mxu0
    %v1589 = vsel %vm200, %v1508, -inf
    %1590 = vmax.xlane.f32.xlu0 %v1589
    %v1591 = vpop.xlane.xlu0 %1590
    %v1592 = vsel %vm200, %v1586, -inf
    %1593 = vmax.xlane.f32.xlu0 %v1592
    %v1594 = vpop.xlane.xlu0 %1593
    %v1595 = vsub.f32 %v1508, %v1591
    %v1596 = vsub.f32 %v1586, %v1594
    %v1597 = vmul.f32 %v1595, 1.442695
    %v1598 = vpow.pop %v1597
    %v1599 = vmul.f32 %v1596, 1.442695
    %v1600 = vpow.pop %v1599
    %v1601 = vsel %vm200, %v1598, 0.0
    %1602 = vadd.xlane.f32.xlu0 %v1601
    %v1603 = vpop.xlane.xlu0 %1602
    %v1604 = vsel %vm200, %v1600, 0.0
    %1605 = vadd.xlane.f32.xlu0 %v1604
    %v1606 = vpop.xlane.xlu0 %1605
    %v1607 = vrcp.pop %v1603
    %v1608 = vrcp.pop %v1606
    %v1609 = vmul.f32 %v1598, %v1607
    %v1610 = vmul.f32 %v1600, %v1608
    %1611 = vrot.lane.b32.xlu0 %v177, 40
    %v1612 = vpop.permute.xlu0 %1611
    %v1615 = vsel %vm200, %v1609, 0
    %1617 = vmatprep.subr.mxu0 0.0
    %1618 = vmatpush1.msra.mxu0 %v1612
    %1619 = vmatprep.subr.mxu0 0.0
    %1620 = vmatpush1.msra.mxu0 0.0
    %1621 = vmatprep.subr.mxu0 0.0
    %1622 = vmatpush1.msra.mxu0 0.0
    %1623 = vmatprep.subr.mxu0 0.0
    %1624 = vmatpush1.msra.mxu0 0.0
    %1625 = vmatprep.subr.mxu0 0.0
    %1626 = vmatpush1.msra.mxu0 0.0
    %1627 = vmatprep.subr.mxu0 0.0
    %1628 = vmatpush1.msra.mxu0 0.0
    %1629 = vmatprep.subr.mxu0 0.0
    %1630 = vmatpush1.msra.mxu0 0.0
    %1631 = vmatprep.subr.mxu0 0.0
    %1632 = vmatpush1.msra.mxu0 0.0
    %1633 = vmatprep.subr.mxu0 0.0
    %1634 = vmatpush1.msra.mxu0 0.0
    %1635 = vmatprep.subr.mxu0 0.0
    %1636 = vmatpush1.msra.mxu0 0.0
    %1637 = vmatprep.subr.mxu0 0.0
    %1638 = vmatpush1.msra.mxu0 0.0
    %1639 = vmatprep.subr.mxu0 0.0
    %1640 = vmatpush1.msra.mxu0 0.0
    %1641 = vmatprep.subr.mxu0 0.0
    %1642 = vmatpush1.msra.mxu0 0.0
    %1643 = vmatprep.subr.mxu0 0.0
    %1644 = vmatpush1.msra.mxu0 0.0
    %1645 = vmatprep.subr.mxu0 0.0
    %1646 = vmatpush1.msra.mxu0 0.0
    %1647 = vmatprep.subr.mxu0 0.0
    %1648 = vmatpush1.msra.mxu0 0.0
    %1649 = vmatprep.subr.mxu0 0.0
    %1650 = vmatpush1.msra.mxu0 0.0
    %1651 = vmatprep.subr.mxu0 0.0
    %1652 = vmatpush1.msra.mxu0 0.0
    %1653 = vmatprep.subr.mxu0 0.0
    %1654 = vmatpush1.msra.mxu0 0.0
    %1655 = vmatprep.subr.mxu0 0.0
    %1656 = vmatpush1.msra.mxu0 0.0
    %1657 = vmatprep.subr.mxu0 0.0
    %1658 = vmatpush1.msra.mxu0 0.0
    %1659 = vmatprep.subr.mxu0 0.0
    %1660 = vmatpush1.msra.mxu0 0.0
    %1661 = vmatprep.subr.mxu0 0.0
    %1662 = vmatpush1.msra.mxu0 0.0
    %1663 = vmatprep.subr.mxu0 0.0
    %1664 = vmatpush1.msra.mxu0 0.0
    %1665 = vmatprep.subr.mxu0 0.0
    %1666 = vmatpush1.msra.mxu0 0.0
    %1667 = vmatprep.subr.mxu0 0.0
    %1668 = vmatpush1.msra.mxu0 0.0
    %1669 = vmatprep.subr.mxu0 0.0
    %1670 = vmatpush1.msra.mxu0 0.0
    %1671 = vmatprep.subr.mxu0 0.0
    %1672 = vmatpush1.msra.mxu0 0.0
    %1673 = vmatprep.subr.mxu0 0.0
    %1674 = vmatpush1.msra.mxu0 0.0
    %1675 = vmatprep.subr.mxu0 0.0
    %1676 = vmatpush1.msra.mxu0 0.0
    %1677 = vmatprep.subr.mxu0 0.0
    %1678 = vmatpush1.msra.mxu0 0.0
    %1679 = vmatprep.subr.mxu0 0.0
    %1680 = vmatpush1.msra.mxu0 0.0
    %1681 = vmatprep.mubr.f32.mxu0 0.0
    %1682 = vmatmul.mubr.f32.gmra.mrb[0].mxu0 %v1615
    %v1683 = vpop.f32.mrb[0].mxu0
    %v1684 = vadd.f32 0.0, %v1683
    %v1685 = vpop.f32.mrb[0].mxu0
    %1686 = vdwg.mxu0
    %1687 = vrot.lane.b32.xlu0 %v182, 40
    %v1688 = vpop.permute.xlu0 %1687
    %v1691 = vsel %vm200, %v1610, 0
    %1693 = vmatprep.subr.mxu0 0.0
    %1694 = vmatpush1.msra.mxu0 %v1688
    %1695 = vmatprep.subr.mxu0 0.0
    %1696 = vmatpush1.msra.mxu0 0.0
    %1697 = vmatprep.subr.mxu0 0.0
    %1698 = vmatpush1.msra.mxu0 0.0
    %1699 = vmatprep.subr.mxu0 0.0
    %1700 = vmatpush1.msra.mxu0 0.0
    %1701 = vmatprep.subr.mxu0 0.0
    %1702 = vmatpush1.msra.mxu0 0.0
    %1703 = vmatprep.subr.mxu0 0.0
    %1704 = vmatpush1.msra.mxu0 0.0
    %1705 = vmatprep.subr.mxu0 0.0
    %1706 = vmatpush1.msra.mxu0 0.0
    %1707 = vmatprep.subr.mxu0 0.0
    %1708 = vmatpush1.msra.mxu0 0.0
    %1709 = vmatprep.subr.mxu0 0.0
    %1710 = vmatpush1.msra.mxu0 0.0
    %1711 = vmatprep.subr.mxu0 0.0
    %1712 = vmatpush1.msra.mxu0 0.0
    %1713 = vmatprep.subr.mxu0 0.0
    %1714 = vmatpush1.msra.mxu0 0.0
    %1715 = vmatprep.subr.mxu0 0.0
    %1716 = vmatpush1.msra.mxu0 0.0
    %1717 = vmatprep.subr.mxu0 0.0
    %1718 = vmatpush1.msra.mxu0 0.0
    %1719 = vmatprep.subr.mxu0 0.0
    %1720 = vmatpush1.msra.mxu0 0.0
    %1721 = vmatprep.subr.mxu0 0.0
    %1722 = vmatpush1.msra.mxu0 0.0
    %1723 = vmatprep.subr.mxu0 0.0
    %1724 = vmatpush1.msra.mxu0 0.0
    %1725 = vmatprep.subr.mxu0 0.0
    %1726 = vmatpush1.msra.mxu0 0.0
    %1727 = vmatprep.subr.mxu0 0.0
    %1728 = vmatpush1.msra.mxu0 0.0
    %1729 = vmatprep.subr.mxu0 0.0
    %1730 = vmatpush1.msra.mxu0 0.0
    %1731 = vmatprep.subr.mxu0 0.0
    %1732 = vmatpush1.msra.mxu0 0.0
    %1733 = vmatprep.subr.mxu0 0.0
    %1734 = vmatpush1.msra.mxu0 0.0
    %1735 = vmatprep.subr.mxu0 0.0
    %1736 = vmatpush1.msra.mxu0 0.0
    %1737 = vmatprep.subr.mxu0 0.0
    %1738 = vmatpush1.msra.mxu0 0.0
    %1739 = vmatprep.subr.mxu0 0.0
    %1740 = vmatpush1.msra.mxu0 0.0
    %1741 = vmatprep.subr.mxu0 0.0
    %1742 = vmatpush1.msra.mxu0 0.0
    %1743 = vmatprep.subr.mxu0 0.0
    %1744 = vmatpush1.msra.mxu0 0.0
    %1745 = vmatprep.subr.mxu0 0.0
    %1746 = vmatpush1.msra.mxu0 0.0
    %1747 = vmatprep.subr.mxu0 0.0
    %1748 = vmatpush1.msra.mxu0 0.0
    %1749 = vmatprep.subr.mxu0 0.0
    %1750 = vmatpush1.msra.mxu0 0.0
    %1751 = vmatprep.subr.mxu0 0.0
    %1752 = vmatpush1.msra.mxu0 0.0
    %1753 = vmatprep.subr.mxu0 0.0
    %1754 = vmatpush1.msra.mxu0 0.0
    %1755 = vmatprep.subr.mxu0 0.0
    %1756 = vmatpush1.msra.mxu0 0.0
    %1757 = vmatprep.mubr.f32.mxu0 0.0
    %1758 = vmatmul.mubr.f32.gmra.mrb[0].mxu0 %v1691
    %v1759 = vpop.f32.mrb[0].mxu0
    %v1760 = vadd.f32 0.0, %v1759
    %v1761 = vpop.f32.mrb[0].mxu0
    %1762 = vdwg.mxu0
    %v1764 = vsel %vm200, %v1684, 0
    %v1767 = vsel %vm200, %v1760, 0
    %1769 = vmatprep.subr.mxu0 0.0
    %1770 = vmatpush1.msra.mxu0 %v194
    %1771 = vmatprep.subr.mxu0 0.0
    %1772 = vmatpush1.msra.mxu0 0.0
    %1773 = vmatprep.subr.mxu0 0.0
    %1774 = vmatpush1.msra.mxu0 0.0
    %1775 = vmatprep.subr.mxu0 0.0
    %1776 = vmatpush1.msra.mxu0 0.0
    %1777 = vmatprep.subr.mxu0 0.0
    %1778 = vmatpush1.msra.mxu0 0.0
    %1779 = vmatprep.subr.mxu0 0.0
    %1780 = vmatpush1.msra.mxu0 0.0
    %1781 = vmatprep.subr.mxu0 0.0
    %1782 = vmatpush1.msra.mxu0 0.0
    %1783 = vmatprep.subr.mxu0 0.0
    %1784 = vmatpush1.msra.mxu0 0.0
    %1785 = vmatprep.subr.mxu0 0.0
    %1786 = vmatpush1.msra.mxu0 0.0
    %1787 = vmatprep.subr.mxu0 0.0
    %1788 = vmatpush1.msra.mxu0 0.0
    %1789 = vmatprep.subr.mxu0 0.0
    %1790 = vmatpush1.msra.mxu0 0.0
    %1791 = vmatprep.subr.mxu0 0.0
    %1792 = vmatpush1.msra.mxu0 0.0
    %1793 = vmatprep.subr.mxu0 0.0
    %1794 = vmatpush1.msra.mxu0 0.0
    %1795 = vmatprep.subr.mxu0 0.0
    %1796 = vmatpush1.msra.mxu0 0.0
    %1797 = vmatprep.subr.mxu0 0.0
    %1798 = vmatpush1.msra.mxu0 0.0
    %1799 = vmatprep.subr.mxu0 0.0
    %1800 = vmatpush1.msra.mxu0 0.0
    %1801 = vmatprep.subr.mxu0 0.0
    %1802 = vmatpush1.msra.mxu0 0.0
    %1803 = vmatprep.subr.mxu0 0.0
    %1804 = vmatpush1.msra.mxu0 0.0
    %1805 = vmatprep.subr.mxu0 0.0
    %1806 = vmatpush1.msra.mxu0 0.0
    %1807 = vmatprep.subr.mxu0 0.0
    %1808 = vmatpush1.msra.mxu0 0.0
    %1809 = vmatprep.subr.mxu0 0.0
    %1810 = vmatpush1.msra.mxu0 0.0
    %1811 = vmatprep.subr.mxu0 0.0
    %1812 = vmatpush1.msra.mxu0 0.0
    %1813 = vmatprep.subr.mxu0 0.0
    %1814 = vmatpush1.msra.mxu0 0.0
    %1815 = vmatprep.subr.mxu0 0.0
    %1816 = vmatpush1.msra.mxu0 0.0
    %1817 = vmatprep.subr.mxu0 0.0
    %1818 = vmatpush1.msra.mxu0 0.0
    %1819 = vmatprep.subr.mxu0 0.0
    %1820 = vmatpush1.msra.mxu0 0.0
    %1821 = vmatprep.subr.mxu0 0.0
    %1822 = vmatpush1.msra.mxu0 0.0
    %1823 = vmatprep.subr.mxu0 0.0
    %1824 = vmatpush1.msra.mxu0 0.0
    %1825 = vmatprep.subr.mxu0 0.0
    %1826 = vmatpush1.msra.mxu0 0.0
    %1827 = vmatprep.subr.mxu0 0.0
    %1828 = vmatpush1.msra.mxu0 0.0
    %1829 = vmatprep.subr.mxu0 0.0
    %1830 = vmatpush1.msra.mxu0 0.0
    %1831 = vmatprep.subr.mxu0 0.0
    %1832 = vmatpush1.msra.mxu0 0.0
    %1833 = vmatprep.mubr.f32.mxu0 0.0
    %1834 = vmatmul.mubr.f32.gmra.mrb[0].mxu0 %v1764
    %v1835 = vpop.f32.mrb[0].mxu0
    %v1836 = vadd.f32 0.0, %v1835
    %v1837 = vpop.f32.mrb[0].mxu0
    %1838 = vmatprep.mubr.f32.mxu0 0.0
    %1839 = vmatmul.mubr.f32.gmra.mrb[0].mxu0 %v1767
    %v1840 = vpop.f32.mrb[0].mxu0
    %v1841 = vadd.f32 0.0, %v1840
    %v1842 = vpop.f32.mrb[0].mxu0
    %1843 = vdwg.mxu0
    %v1844 = vadd.f32 %v1431, %v1836
    %v1845 = vadd.f32 %v1432, %v1841
    %v1846 = vadd.f32 %v45, %v1844
    %v1847 = vadd.f32 %v46, %v1845
    %v1848 = vld [vmem:[%s6] sm:$0x1]
    %v1850 = vlaneseq
    %v1851 = vshrl.u32 %v1850, 7
    %v1852 = vsub.s32 0, %v1851
    %v1853 = vrot.slane %v1848, %v1852
    %v1855 = vadd.f32 %v1846, %v1853
    %v1856 = vadd.f32 %v1847, %v1853
    %v1857 = vld [vmem:[%s7] sm:$0x1]
    %v1858 = vld [vmem:[%s8] sm:$0x1]
    %v1859 = vsel %vm49, %v1855, 0.0
    %1860 = vadd.xlane.f32.xlu0 %v1859
    %v1861 = vpop.xlane.xlu0 %1860
    %v1862 = vsel %vm49, %v1856, 0.0
    %1863 = vadd.xlane.f32.xlu0 %v1862
    %v1864 = vpop.xlane.xlu0 %1863
    %v1865 = vmul.f32 %v1861, %v56
    %v1866 = vmul.f32 %v1864, %v56
    %v1867 = vsub.f32 %v1855, %v1865
    %v1868 = vsub.f32 %v1856, %v1866
    %v1869 = vmul.f32 %v1867, %v1867
    %v1870 = vmul.f32 %v1868, %v1868
    %v1871 = vsel %vm49, %v1869, 0.0
    %1872 = vadd.xlane.f32.xlu0 %v1871
    %v1873 = vpop.xlane.xlu0 %1872
    %v1874 = vsel %vm49, %v1870, 0.0
    %1875 = vadd.xlane.f32.xlu0 %v1874
    %v1876 = vpop.xlane.xlu0 %1875
    %v1877 = vmul.f32 %v1873, %v56
    %v1878 = vmul.f32 %v1876, %v56
    %v1879 = vadd.f32 %v1877, 1e-05
    %v1880 = vadd.f32 %v1878, 1e-05
    %v1881 = vrsqrt.pop %v1879
    %v1882 = vrsqrt.pop %v1880
    %v1883 = vmul.f32 %v1867, %v1881
    %v1884 = vmul.f32 %v1868, %v1882
    %v1886 = vlaneseq
    %v1887 = vshrl.u32 %v1886, 7
    %v1888 = vsub.s32 0, %v1887
    %v1889 = vrot.slane %v1857, %v1888
    %v1891 = vmul.f32 %v1883, %v1889
    %v1892 = vmul.f32 %v1884, %v1889
    %v1894 = vlaneseq
    %v1895 = vshrl.u32 %v1894, 7
    %v1896 = vsub.s32 0, %v1895
    %v1897 = vrot.slane %v1858, %v1896
    %v1899 = vadd.f32 %v1891, %v1897
    %v1900 = vadd.f32 %v1892, %v1897
    %v1901 = vld [vmem:[%s9] sm:$0xff]
    %v1902 = vld [vmem:[%s9 + $0x8] sm:$0xff]
    %v1903 = vld [vmem:[%s9 + $0x10] sm:$0xff]
    %v1904 = vld [vmem:[%s9 + $0x18] sm:$0xff]
    %v1905 = vld [vmem:[%s10] sm:$0x1]
    %v1907 = vlaneseq
    %v1908 = vshrl.u32 %v1907, 7
    %v1909 = vsub.s32 0, %v1908
    %v1910 = vrot.slane %v1905, %v1909
    %v1913 = vsel %vm49, %v1899, 0
    %v1916 = vsel %vm49, %v1900, 0
    %1918 = vmatprep.subr.mxu0 0.0
    %1919 = vmatpush1.msra.mxu0 %v1901
    %1920 = vmatprep.subr.mxu0 0.0
    %1921 = vmatpush1.msra.mxu0 %v1902
    %1922 = vmatprep.subr.mxu0 0.0
    %1923 = vmatpush1.msra.mxu0 %v1903
    %1924 = vmatprep.subr.mxu0 0.0
    %1925 = vmatpush1.msra.mxu0 %v1904
    %1926 = vmatprep.subr.mxu0 0.0
    %1927 = vmatpush1.msra.mxu0 0.0
    %1928 = vmatprep.subr.mxu0 0.0
    %1929 = vmatpush1.msra.mxu0 0.0
    %1930 = vmatprep.subr.mxu0 0.0
    %1931 = vmatpush1.msra.mxu0 0.0
    %1932 = vmatprep.subr.mxu0 0.0
    %1933 = vmatpush1.msra.mxu0 0.0
    %1934 = vmatprep.subr.mxu0 0.0
    %1935 = vmatpush1.msra.mxu0 0.0
    %1936 = vmatprep.subr.mxu0 0.0
    %1937 = vmatpush1.msra.mxu0 0.0
    %1938 = vmatprep.subr.mxu0 0.0
    %1939 = vmatpush1.msra.mxu0 0.0
    %1940 = vmatprep.subr.mxu0 0.0
    %1941 = vmatpush1.msra.mxu0 0.0
    %1942 = vmatprep.subr.mxu0 0.0
    %1943 = vmatpush1.msra.mxu0 0.0
    %1944 = vmatprep.subr.mxu0 0.0
    %1945 = vmatpush1.msra.mxu0 0.0
    %1946 = vmatprep.subr.mxu0 0.0
    %1947 = vmatpush1.msra.mxu0 0.0
    %1948 = vmatprep.subr.mxu0 0.0
    %1949 = vmatpush1.msra.mxu0 0.0
    %1950 = vmatprep.subr.mxu0 0.0
    %1951 = vmatpush1.msra.mxu0 0.0
    %1952 = vmatprep.subr.mxu0 0.0
    %1953 = vmatpush1.msra.mxu0 0.0
    %1954 = vmatprep.subr.mxu0 0.0
    %1955 = vmatpush1.msra.mxu0 0.0
    %1956 = vmatprep.subr.mxu0 0.0
    %1957 = vmatpush1.msra.mxu0 0.0
    %1958 = vmatprep.subr.mxu0 0.0
    %1959 = vmatpush1.msra.mxu0 0.0
    %1960 = vmatprep.subr.mxu0 0.0
    %1961 = vmatpush1.msra.mxu0 0.0
    %1962 = vmatprep.subr.mxu0 0.0
    %1963 = vmatpush1.msra.mxu0 0.0
    %1964 = vmatprep.subr.mxu0 0.0
    %1965 = vmatpush1.msra.mxu0 0.0
    %1966 = vmatprep.subr.mxu0 0.0
    %1967 = vmatpush1.msra.mxu0 0.0
    %1968 = vmatprep.subr.mxu0 0.0
    %1969 = vmatpush1.msra.mxu0 0.0
    %1970 = vmatprep.subr.mxu0 0.0
    %1971 = vmatpush1.msra.mxu0 0.0
    %1972 = vmatprep.subr.mxu0 0.0
    %1973 = vmatpush1.msra.mxu0 0.0
    %1974 = vmatprep.subr.mxu0 0.0
    %1975 = vmatpush1.msra.mxu0 0.0
    %1976 = vmatprep.subr.mxu0 0.0
    %1977 = vmatpush1.msra.mxu0 0.0
    %1978 = vmatprep.subr.mxu0 0.0
    %1979 = vmatpush1.msra.mxu0 0.0
    %1980 = vmatprep.subr.mxu0 0.0
    %1981 = vmatpush1.msra.mxu0 0.0
    %1982 = vmatprep.mubr.f32.mxu0 0.0
    %1983 = vmatmul.mubr.f32.gmra.mrb[0].mxu0 %v1913
    %v1984 = vpop.f32.mrb[0].mxu0
    %v1985 = vadd.f32 %v1910, %v1984
    %v1986 = vpop.f32.mrb[0].mxu0
    %1987 = vmatprep.mubr.f32.mxu0 0.0
    %1988 = vmatmul.mubr.f32.gmra.mrb[0].mxu0 %v1916
    %v1989 = vpop.f32.mrb[0].mxu0
    %v1990 = vadd.f32 %v1910, %v1989
    %v1991 = vpop.f32.mrb[0].mxu0
    %1992 = vdwg.mxu0
    %v1993 = vmul.f32 %v1985, 0.5
    %v1994 = vmul.f32 %v1990, 0.5
    %v1995 = vmul.f32 %v1985, 0.044715
    %v1996 = vmul.f32 %v1990, 0.044715
    %v1997 = vmul.f32 %v1995, %v1985
    %v1998 = vmul.f32 %v1996, %v1990
    %v1999 = vmul.f32 %v1997, %v1985
    %v2000 = vmul.f32 %v1998, %v1990
    %v2001 = vadd.f32 %v1985, %v1999
    %v2002 = vadd.f32 %v1990, %v2000
    %v2003 = vmul.f32 %v2001, 0.7978846
    %v2004 = vmul.f32 %v2002, 0.7978846
    %v2005 = vtanh.pop %v2003
    %v2006 = vtanh.pop %v2004
    %v2007 = vadd.f32 %v2005, 1.0
    %v2008 = vadd.f32 %v2006, 1.0
    %v2009 = vmul.f32 %v1993, %v2007
    %v2010 = vmul.f32 %v1994, %v2008
    %v2011 = vld [vmem:[%s11] sm:$0xff]
    %v2012 = vld [vmem:[%s11 + $0x8] sm:$0xff]
    %v2013 = vld [vmem:[%s11 + $0x10] sm:$0xff]
    %v2014 = vld [vmem:[%s11 + $0x18] sm:$0xff]
    %v2015 = vld [vmem:[%s11 + $0x20] sm:$0xff]
    %v2016 = vld [vmem:[%s11 + $0x28] sm:$0xff]
    %v2017 = vld [vmem:[%s11 + $0x30] sm:$0xff]
    %v2018 = vld [vmem:[%s11 + $0x38] sm:$0xff]
    %v2019 = vld [vmem:[%s11 + $0x40] sm:$0xff]
    %v2020 = vld [vmem:[%s11 + $0x48] sm:$0xff]
    %v2021 = vld [vmem:[%s11 + $0x50] sm:$0xff]
    %v2022 = vld [vmem:[%s11 + $0x58] sm:$0xff]
    %v2023 = vld [vmem:[%s11 + $0x60] sm:$0xff]
    %v2024 = vld [vmem:[%s11 + $0x68] sm:$0xff]
    %v2025 = vld [vmem:[%s11 + $0x70] sm:$0xff]
    %v2026 = vld [vmem:[%s11 + $0x78] sm:$0xff]
    %v2027 = vld [vmem:[%s12] sm:$0x1]
    %v2029 = vlaneseq
    %v2030 = vshrl.u32 %v2029, 7
    %v2031 = vsub.s32 0, %v2030
    %v2032 = vrot.slane %v2027, %v2031
    %2034 = vmatprep.subr.mxu0 0.0
    %2035 = vmatpush1.msra.mxu0 %v2011
    %2036 = vmatprep.subr.mxu0 0.0
    %2037 = vmatpush1.msra.mxu0 %v2012
    %2038 = vmatprep.subr.mxu0 0.0
    %2039 = vmatpush1.msra.mxu0 %v2013
    %2040 = vmatprep.subr.mxu0 0.0
    %2041 = vmatpush1.msra.mxu0 %v2014
    %2042 = vmatprep.subr.mxu0 0.0
    %2043 = vmatpush1.msra.mxu0 %v2015
    %2044 = vmatprep.subr.mxu0 0.0
    %2045 = vmatpush1.msra.mxu0 %v2016
    %2046 = vmatprep.subr.mxu0 0.0
    %2047 = vmatpush1.msra.mxu0 %v2017
    %2048 = vmatprep.subr.mxu0 0.0
    %2049 = vmatpush1.msra.mxu0 %v2018
    %2050 = vmatprep.subr.mxu0 0.0
    %2051 = vmatpush1.msra.mxu0 %v2019
    %2052 = vmatprep.subr.mxu0 0.0
    %2053 = vmatpush1.msra.mxu0 %v2020
    %2054 = vmatprep.subr.mxu0 0.0
    %2055 = vmatpush1.msra.mxu0 %v2021
    %2056 = vmatprep.subr.mxu0 0.0
    %2057 = vmatpush1.msra.mxu0 %v2022
    %2058 = vmatprep.subr.mxu0 0.0
    %2059 = vmatpush1.msra.mxu0 %v2023
    %2060 = vmatprep.subr.mxu0 0.0
    %2061 = vmatpush1.msra.mxu0 %v2024
    %2062 = vmatprep.subr.mxu0 0.0
    %2063 = vmatpush1.msra.mxu0 %v2025
    %2064 = vmatprep.subr.mxu0 0.0
    %2065 = vmatpush1.msra.mxu0 %v2026
    %2066 = vmatprep.subr.mxu0 0.0
    %2067 = vmatpush1.msra.mxu0 0.0
    %2068 = vmatprep.subr.mxu0 0.0
    %2069 = vmatpush1.msra.mxu0 0.0
    %2070 = vmatprep.subr.mxu0 0.0
    %2071 = vmatpush1.msra.mxu0 0.0
    %2072 = vmatprep.subr.mxu0 0.0
    %2073 = vmatpush1.msra.mxu0 0.0
    %2074 = vmatprep.subr.mxu0 0.0
    %2075 = vmatpush1.msra.mxu0 0.0
    %2076 = vmatprep.subr.mxu0 0.0
    %2077 = vmatpush1.msra.mxu0 0.0
    %2078 = vmatprep.subr.mxu0 0.0
    %2079 = vmatpush1.msra.mxu0 0.0
    %2080 = vmatprep.subr.mxu0 0.0
    %2081 = vmatpush1.msra.mxu0 0.0
    %2082 = vmatprep.subr.mxu0 0.0
    %2083 = vmatpush1.msra.mxu0 0.0
    %2084 = vmatprep.subr.mxu0 0.0
    %2085 = vmatpush1.msra.mxu0 0.0
    %2086 = vmatprep.subr.mxu0 0.0
    %2087 = vmatpush1.msra.mxu0 0.0
    %2088 = vmatprep.subr.mxu0 0.0
    %2089 = vmatpush1.msra.mxu0 0.0
    %2090 = vmatprep.subr.mxu0 0.0
    %2091 = vmatpush1.msra.mxu0 0.0
    %2092 = vmatprep.subr.mxu0 0.0
    %2093 = vmatpush1.msra.mxu0 0.0
    %2094 = vmatprep.subr.mxu0 0.0
    %2095 = vmatpush1.msra.mxu0 0.0
    %2096 = vmatprep.subr.mxu0 0.0
    %2097 = vmatpush1.msra.mxu0 0.0
    %2098 = vmatprep.mubr.f32.mxu0 0.0
    %2099 = vmatmul.mubr.f32.gmra.mrb[0].mxu0 %v2009
    %v2100 = vpop.f32.mrb[0].mxu0
    %v2101 = vadd.f32 %v2032, %v2100
    %v2102 = vpop.f32.mrb[0].mxu0
    %2103 = vmatprep.mubr.f32.mxu0 0.0
    %2104 = vmatmul.mubr.f32.gmra.mrb[0].mxu0 %v2010
    %v2105 = vpop.f32.mrb[0].mxu0
    %v2106 = vadd.f32 %v2032, %v2105
    %v2107 = vpop.f32.mrb[0].mxu0
    %2108 = vdwg.mxu0
    %v2109 = vadd.f32 %v1855, %v2101
    %v2110 = vadd.f32 %v1856, %v2106
    %2111 = vst.msk [vmem:[#allocation2] sm:$0xff] %vm49, %v2109
    %2112 = vst.msk [vmem:[#allocation2 + $0x8] sm:$0xff] %vm49, %v2110
    // Predicated region
    $region54: #{tpu_custom_call.1} parent=1 // pred_check
      _
    $region55: #{tpu_custom_call.1} parent=1 // pred_check_branch
      %2114 = sbr.rel (0) target = $region57
    $region56: #{tpu_custom_call.1} parent=1 // pred_region
      %s2116 = ssub.s32 256, 256
      %2117 = vsyncadd [#allocation3], %s2116
      %s2118 = sshll.u32 [#allocation2], 4
      %s2119 = int_to_ptr.vmem [resolvable:$true] %s2118
      %2124 = dma.vmem_to_hbm [thread:$0]  %s2119, 256, %s13, [#allocation3], 128, 128, 8
    $region57: #{tpu_custom_call.1} parent=1 // pred_fallthru
      _
    // Predicated region
    $region58: #{tpu_custom_call.1} parent=1 // pred_check
      _
    $region59: #{tpu_custom_call.1} parent=1 // pred_check_branch
      %2126 = sbr.rel (0) target = $region61
    $region60: #{tpu_custom_call.1} parent=1 // pred_region
      %2127 = dma.done [#allocation3], 256
    $region61: #{tpu_custom_call.1} parent=1 // pred_fallthru
      _
    %2128 = vsyncpa [#allocation3], 1

</llo_original>
